<compile_context>
chip_gen: v5e
topology: v5e:2x2
jax: 0.10.0
libtpu: 0.0.40
codegen_flags: <defaults>
</compile_context>

<pallas_src>
import functools
import math

import jax
import jax.numpy as jnp
from jax.experimental import pallas as pl
from jax.experimental.pallas import tpu as pltpu


# ----------------------------------------------------------------------------
# Device-derived constants
# ----------------------------------------------------------------------------
def _tpu_vmem_limit():
    # 75% of physical per-core VMEM (leaves room for double buffers / compiler
    # scratch); falls back to a conservative 48 MiB (safe on v7x's 64 MiB).
    try:
        cap = pltpu.get_tpu_info().vmem_capacity_bytes
        return int(cap) * 3 // 4
    except Exception:
        return 48 * 1024 * 1024


def _has_bf16_vpu():
    # v6e / v7x have bf16 VPU + EUP; v5e and older do not.
    try:
        kind = jax.devices()[0].device_kind.lower()
    except Exception:
        return False
    return not any(t in kind for t in ("v2", "v3", "v4", "v5"))


_VMEM_LIMIT = _tpu_vmem_limit()
_HAS_BF16_VPU = _has_bf16_vpu()


def _round_up(x, m):
    return (x + m - 1) // m * m


def _plan_n(n):
    """Padding + tiling plan for the token axis -> (n_pad, tm, tq, tkv).

    Tiles always divide n_pad exactly (no fragile divisor search): small N is a
    single padded tile; large N is padded to a multiple of 128 with tq=128
    (bounds the f32 score tile / vreg pressure) and tkv up to 512 (fewer grid
    steps, less K/V re-fetch).
    """
    if n <= 128:
        n_pad = _round_up(n, 8)
        return n_pad, n_pad, n_pad, n_pad
    n_pad = _round_up(n, 128)
    tq = 128
    tkv = 512 if n_pad % 512 == 0 else (256 if n_pad % 256 == 0 else 128)
    tm = 256 if n_pad % 256 == 0 else 128
    return n_pad, tm, tq, tkv


# ----------------------------------------------------------------------------
# Fused Q/K/V projection kernel (tiled over N)
# ----------------------------------------------------------------------------
def _qkv_proj_kernel(x_ref, w_ref, qkv_ref):
    # x_ref: (tm, Cin)  w_ref: (Cin, 3*inner)  qkv_ref: (tm, 3*inner)
    qkv_ref[...] = jnp.dot(
        x_ref[...], w_ref[...], preferred_element_type=jnp.float32
    ).astype(qkv_ref.dtype)


def qkv_proj_pallas(x, w_qkv, tm):
    """x: [B, Np, Cin], w_qkv: [Cin, 3*inner] -> [B, Np, 3*inner]."""
    B, Np, Cin = x.shape
    Cout = w_qkv.shape[1]
    # NOTE: the weight's index_map is grid-invariant, so Pallas keeps the same
    # block resident and never re-DMAs it.  (pl.Buffered(1) would additionally
    # halve its VMEM footprint; left off for broad toolchain compatibility.)
    return pl.pallas_call(
        _qkv_proj_kernel,
        out_shape=jax.ShapeDtypeStruct((B, Np, Cout), x.dtype),
        grid_spec=pltpu.PrefetchScalarGridSpec(
            num_scalar_prefetch=0,
            grid=(B, Np // tm),
            in_specs=[
                pl.BlockSpec((None, tm, Cin), lambda b, i: (b, i, 0)),
                pl.BlockSpec((Cin, Cout), lambda b, i: (0, 0)),
            ],
            out_specs=pl.BlockSpec((None, tm, Cout), lambda b, i: (b, i, 0)),
        ),
        compiler_params=pltpu.CompilerParams(
            dimension_semantics=("parallel", "parallel"),
            vmem_limit_bytes=_VMEM_LIMIT,
        ),
    )(x, w_qkv)


# ----------------------------------------------------------------------------
# Flash attention kernel (online softmax, tiled over q and kv)
# Grid is (B, H, q_tiles, kv_tiles); kv MUST stay innermost/"arbitrary" because
# the output block is written only at the last kv step.
# ----------------------------------------------------------------------------
def _flash_attn_kernel(q_ref, k_ref, v_ref, o_ref, m_sc, l_sc, acc_sc, *,
                       kv_tile, n_valid, n_pad, approx_recip, softmax_bf16):
    kv = pl.program_id(3)

    @pl.when(kv == 0)
    def _():
        m_sc[...] = jnp.full_like(m_sc, -jnp.inf)
        l_sc[...] = jnp.zeros_like(l_sc)
        acc_sc[...] = jnp.zeros_like(acc_sc)

    # q was pre-scaled (softmax scale folded into Wq); contract last dims of
    # q and k so no K transpose is materialized in-kernel.
    s = jax.lax.dot_general(
        q_ref[...], k_ref[...],
        dimension_numbers=(((1,), (1,)), ((), ())),
        preferred_element_type=jnp.float32,
    )                                                   # (tq, tkv) f32

    if n_valid < n_pad:
        # Token axis was padded: mask padded kv columns (large negative, never
        # -inf, so fully-masked rows stay finite instead of producing NaNs).
        col = jax.lax.broadcasted_iota(jnp.int32, s.shape, 1) + kv * kv_tile
        s = jnp.where(col < n_valid, s, -1e30)

    m_prev = m_sc[...]
    m_new = jnp.maximum(m_prev, jnp.max(s, axis=-1, keepdims=True))
    alpha = jnp.exp(m_prev - m_new)                     # (tq, 1) f32

    if softmax_bf16:
        # bf16 EUP/VPU path (v6e/v7x): exp in bf16, running state stays f32.
        p = jnp.exp((s - m_new).astype(jnp.bfloat16))
        l_add = jnp.sum(p.astype(jnp.float32), axis=-1, keepdims=True)
    else:
        p = jnp.exp(s - m_new)
        l_add = jnp.sum(p, axis=-1, keepdims=True)

    l_sc[...] = alpha * l_sc[...] + l_add
    acc_sc[...] = alpha * acc_sc[...] + jnp.dot(
        p.astype(v_ref.dtype), v_ref[...], preferred_element_type=jnp.float32
    )
    m_sc[...] = m_new

    @pl.when(kv == pl.num_programs(3) - 1)
    def _():
        inv_l = pl.reciprocal(l_sc[...], approx=approx_recip)
        o_ref[...] = (acc_sc[...] * inv_l).astype(o_ref.dtype)


def _flash_scratch(tq, dh):
    return [
        pltpu.VMEM((tq, 1), jnp.float32),    # running max
        pltpu.VMEM((tq, 1), jnp.float32),    # running sum
        pltpu.VMEM((tq, dh), jnp.float32),   # f32 accumulator
    ]


def flash_mha_fused(qkv, *, heads, dh, n_valid, tq, tkv, out_dtype,
                    approx_recip, softmax_bf16):
    """Fast path (dh % 128 == 0): heads sliced straight out of [B,Np,3*inner]
    via lane-block index_maps; output written straight into [B,Np,inner]."""
    B, Np, _ = qkv.shape
    inner = heads * dh
    kernel = functools.partial(
        _flash_attn_kernel, kv_tile=tkv, n_valid=n_valid, n_pad=Np,
        approx_recip=approx_recip, softmax_bf16=softmax_bf16)

    q_spec = pl.BlockSpec((None, tq, dh), lambda b, h, qi, ki: (b, qi, h))
    k_spec = pl.BlockSpec((None, tkv, dh), lambda b, h, qi, ki: (b, ki, heads + h))
    v_spec = pl.BlockSpec((None, tkv, dh), lambda b, h, qi, ki: (b, ki, 2 * heads + h))
    o_spec = pl.BlockSpec((None, tq, dh), lambda b, h, qi, ki: (b, qi, h))

    return pl.pallas_call(
        kernel,
        out_shape=jax.ShapeDtypeStruct((B, Np, inner), out_dtype),
        grid_spec=pltpu.PrefetchScalarGridSpec(
            num_scalar_prefetch=0,
            grid=(B, heads, Np // tq, Np // tkv),
            in_specs=[q_spec, k_spec, v_spec],
            out_specs=o_spec,
            scratch_shapes=_flash_scratch(tq, dh),
        ),
        compiler_params=pltpu.CompilerParams(
            dimension_semantics=("parallel", "parallel", "parallel", "arbitrary"),
            vmem_limit_bytes=_VMEM_LIMIT,
        ),
    )(qkv, qkv, qkv)


def flash_mha_headmajor(qkv5, *, n_valid, tq, tkv, approx_recip, softmax_bf16):
    """Fallback path (dh not lane-aligned): qkv5 is [3, B, H, Np, Dh] (already
    head-split by one XLA transpose); returns [B, H, Np, Dh]."""
    _, B, H, Np, Dh = qkv5.shape
    kernel = functools.partial(
        _flash_attn_kernel, kv_tile=tkv, n_valid=n_valid, n_pad=Np,
        approx_recip=approx_recip, softmax_bf16=softmax_bf16)

    q_spec = pl.BlockSpec((None, None, None, tq, Dh),
                          lambda b, h, qi, ki: (0, b, h, qi, 0))
    k_spec = pl.BlockSpec((None, None, None, tkv, Dh),
                          lambda b, h, qi, ki: (1, b, h, ki, 0))
    v_spec = pl.BlockSpec((None, None, None, tkv, Dh),
                          lambda b, h, qi, ki: (2, b, h, ki, 0))
    o_spec = pl.BlockSpec((None, None, tq, Dh),
                          lambda b, h, qi, ki: (b, h, qi, 0))

    return pl.pallas_call(
        kernel,
        out_shape=jax.ShapeDtypeStruct((B, H, Np, Dh), qkv5.dtype),
        grid_spec=pltpu.PrefetchScalarGridSpec(
            num_scalar_prefetch=0,
            grid=(B, H, Np // tq, Np // tkv),
            in_specs=[q_spec, k_spec, v_spec],
            out_specs=o_spec,
            scratch_shapes=_flash_scratch(tq, Dh),
        ),
        compiler_params=pltpu.CompilerParams(
            dimension_semantics=("parallel", "parallel", "parallel", "arbitrary"),
            vmem_limit_bytes=_VMEM_LIMIT,
        ),
    )(qkv5, qkv5, qkv5)


# ----------------------------------------------------------------------------
# Output projection: one dense (tm, inner) @ (inner, Cq) matmul per tile
# (deep MXU contraction over `inner`, lane-dense blocks). Bias added in f32.
# ----------------------------------------------------------------------------
def _out_proj_kernel(o_ref, w_ref, b_ref, y_ref):
    y_ref[...] = (
        jnp.dot(o_ref[...], w_ref[...], preferred_element_type=jnp.float32)
        + b_ref[...]
    ).astype(y_ref.dtype)


def out_proj_pallas(o, wo, bias, out_dtype, tm):
    """o: [B, Np, inner], wo: [inner, Cq], bias: [1, Cq] f32 -> [B, Np, Cq]."""
    B, Np, inner = o.shape
    Cq = wo.shape[1]
    return pl.pallas_call(
        _out_proj_kernel,
        out_shape=jax.ShapeDtypeStruct((B, Np, Cq), out_dtype),
        grid_spec=pltpu.PrefetchScalarGridSpec(
            num_scalar_prefetch=0,
            grid=(B, Np // tm),
            in_specs=[
                pl.BlockSpec((None, tm, inner), lambda b, i: (b, i, 0)),
                pl.BlockSpec((inner, Cq), lambda b, i: (0, 0)),
                pl.BlockSpec((1, Cq), lambda b, i: (0, 0)),
            ],
            out_specs=pl.BlockSpec((None, tm, Cq), lambda b, i: (b, i, 0)),
        ),
        compiler_params=pltpu.CompilerParams(
            dimension_semantics=("parallel", "parallel"),
            vmem_limit_bytes=_VMEM_LIMIT,
        ),
    )(o, wo, bias)


# ----------------------------------------------------------------------------
# Module
# ----------------------------------------------------------------------------
def init_attention_params(key, query_dim, heads, dim_head, context_dim=None):
    context_dim = query_dim if context_dim is None else context_dim
    inner_dim = heads * dim_head
    k1, k2, k3, k4, k5 = jax.random.split(key, 5)
    scale_q = 1.0 / math.sqrt(query_dim)
    scale_c = 1.0 / math.sqrt(context_dim)
    scale_i = 1.0 / math.sqrt(inner_dim)
    return {
        "wq": jax.random.uniform(k1, (query_dim, inner_dim), jnp.float32,
                                 -scale_q, scale_q),
        "wk": jax.random.uniform(k2, (context_dim, inner_dim), jnp.float32,
                                 -scale_c, scale_c),
        "wv": jax.random.uniform(k3, (context_dim, inner_dim), jnp.float32,
                                 -scale_c, scale_c),
        "wo": jax.random.uniform(k4, (inner_dim, query_dim), jnp.float32,
                                 -scale_i, scale_i),
        "bo": jax.random.uniform(k5, (query_dim,), jnp.float32,
                                 -scale_i, scale_i),
    }


def attention_forward(params, x, heads, compute_dtype=None):
    """x: [B, N, query_dim] -> [B, N, query_dim].

    compute_dtype controls the MXU-input precision; default bf16 (f32
    accumulation and f32 softmax state throughout). Pass jnp.float32 for a
    bit-tight reference path.
    """
    B, N, Cq = x.shape
    inner = params["wq"].shape[1]
    dh = inner // heads
    scale = 1.0 / math.sqrt(dh)  # == dim_head ** -0.5 (SDPA default)
    # bf16 MXU inputs by default: ~3-6x matmul throughput on every generation,
    # negligible accuracy loss given f32 accumulation.
    cdt = jnp.bfloat16 if compute_dtype is None else compute_dtype

    n_pad, tm, tq, tkv = _plan_n(N)

    xp = x.astype(cdt)
    if n_pad != N:
        xp = jnp.pad(xp, ((0, 0), (0, n_pad - N), (0, 0)))

    # Fold the softmax scale into Wq (exact for the linear map; on the bf16
    # path the scaled weight is quantized once, same rounding as the weight
    # itself) and fuse Q/K/V into one matmul so x is streamed from HBM once.
    w_qkv = jnp.concatenate(
        [params["wq"] * scale, params["wk"], params["wv"]], axis=1
    ).astype(cdt)
    qkv = qkv_proj_pallas(xp, w_qkv, tm=tm)              # [B, Np, 3*inner]

    approx_recip = cdt == jnp.bfloat16
    softmax_bf16 = approx_recip and _HAS_BF16_VPU        # v6e/v7x only

    if dh % 128 == 0:
        # Fast path: heads are lane-aligned blocks of the fused QKV tensor ->
        # no head-split transpose, and the flash output lands directly in the
        # [B, Np, inner] layout the output projection wants.
        o2 = flash_mha_fused(qkv, heads=heads, dh=dh, n_valid=N, tq=tq, tkv=tkv,
                             out_dtype=cdt, approx_recip=approx_recip,
                             softmax_bf16=softmax_bf16)  # [B, Np, inner]
    else:
        # TODO(synk): for dim_head not a multiple of 128 the head split cannot
        # be expressed as a lane-aligned BlockSpec; keep one XLA transpose each
        # way (this is the main avoidable inter-kernel HBM cost at small Dh).
        qkv5 = qkv.reshape(B, n_pad, 3, heads, dh).transpose(2, 0, 3, 1, 4)
        o = flash_mha_headmajor(qkv5, n_valid=N, tq=tq, tkv=tkv,
                                approx_recip=approx_recip,
                                softmax_bf16=softmax_bf16)  # [B, H, Np, dh]
        o2 = o.transpose(0, 2, 1, 3).reshape(B, n_pad, inner)

    # to_out: Linear + Dropout(p=0.0) == Linear. Single deep-contraction matmul.
    wo = params["wo"].astype(cdt)
    bias = params["bo"].astype(jnp.float32).reshape(1, Cq)
    y = out_proj_pallas(o2, wo, bias, out_dtype=x.dtype, tm=tm)
    if n_pad != N:
        y = y[:, :N, :]
    return y


# Pure-JAX reference for sanity checking.
def attention_ref(params, x, heads):
    B, N, _ = x.shape
    q = x @ params["wq"]
    k = x @ params["wk"]
    v = x @ params["wv"]
    inner = q.shape[-1]
    dh = inner // heads
    qh = q.reshape(B, N, heads, dh).transpose(0, 2, 1, 3)
    kh = k.reshape(B, N, heads, dh).transpose(0, 2, 1, 3)
    vh = v.reshape(B, N, heads, dh).transpose(0, 2, 1, 3)
    s = jnp.einsum("bhqd,bhkd->bhqk", qh, kh) / math.sqrt(dh)
    p = jax.nn.softmax(s, axis=-1)
    oh = jnp.einsum("bhqk,bhkd->bhqd", p, vh)
    out = oh.transpose(0, 2, 1, 3).reshape(B, N, inner)
    return out @ params["wo"] + params["bo"]


if __name__ == "__main__":
    # TODO(synk): jagged VDBTensor batches are modeled as a dense [B, N, C]
    # tensor with a uniform token count per grid.
    key = jax.random.PRNGKey(0)
    fwd = jax.jit(attention_forward, static_argnames=("heads", "compute_dtype"))

    configs = [
        # (B, N, query_dim, heads, dim_head)
        (2, 16, 32, 2, 128),   # fast path: dh % 128 == 0, no transposes
        (2, 16, 32, 2, 32),    # fallback path: dh < 128 (head-split transpose)
        (1, 20, 32, 2, 128),   # N not a multiple of 8 -> padding + kv masking
    ]

    for (B, N, qd, heads, dh) in configs:
        key, kx, kp = jax.random.split(key, 3)
        x = jax.random.normal(kx, (B, N, qd), dtype=jnp.float32)
        params = init_attention_params(kp, qd, heads, dh)
        y_ref = attention_ref(params, x, heads)

        # f32 MXU-input path: strict check against the pure-JAX reference.
        y32 = jax.block_until_ready(
            fwd(params, x, heads=heads, compute_dtype=jnp.float32))
        assert y32.shape == (B, N, qd)
        assert jnp.allclose(y32, y_ref, atol=1e-4, rtol=1e-4), \
            f"f32 mismatch vs reference (cfg B={B} N={N} dh={dh})"

        # Default path: bf16 MXU inputs, f32 accumulation / softmax state.
        ybf = jax.block_until_ready(fwd(params, x, heads=heads))
        assert ybf.shape == (B, N, qd)
        assert jnp.allclose(ybf, y_ref, atol=6e-2, rtol=6e-2), \
            f"bf16 mismatch vs reference (cfg B={B} N={N} dh={dh})"

    print("KERNEL_OK")
</pallas_src>

<mosaic_0001>
module attributes {stable_mosaic.version = 11 : i64} {
  func.func @_flash_attn_kernel(%arg0: i32, %arg1: i32, %arg2: i32, %arg3: i32, %arg4: memref<1x16x128xf32, #tpu.memory_space<vmem>>, %arg5: memref<1x16x128xf32, #tpu.memory_space<vmem>>, %arg6: memref<1x16x128xf32, #tpu.memory_space<vmem>>, %arg7: memref<1x16x128xf32, #tpu.memory_space<vmem>>, %arg8: memref<16x1xf32, #tpu.memory_space<vmem>>, %arg9: memref<16x1xf32, #tpu.memory_space<vmem>>, %arg10: memref<16x128xf32, #tpu.memory_space<vmem>>) attributes {dimension_semantics = [#tpu.dimension_semantics<parallel>, #tpu.dimension_semantics<parallel>, #tpu.dimension_semantics<parallel>, #tpu.dimension_semantics<arbitrary>], iteration_bounds = array<i64: 2, 2, 1, 1>, scalar_prefetch = 0 : i64, scratch_operands = 3 : i64, tpu.core_type = #tpu.core_type<tc>, window_params = [{transform_indices = @transform_0, window_bounds = array<i64: 1, 16, 128>}, {transform_indices = @transform_1, window_bounds = array<i64: 1, 16, 128>}, {transform_indices = @transform_2, window_bounds = array<i64: 1, 16, 128>}, {transform_indices = @transform_3, window_bounds = array<i64: 1, 16, 128>}]} {
    %c0_i32 = arith.constant 0 : i32
    %0 = arith.cmpi eq, %arg3, %c0_i32 : i32
    %1 = arith.extui %0 : i1 to i32
    %c0_i32_0 = arith.constant 0 : i32
    %2 = arith.cmpi ne, %1, %c0_i32_0 : i32
    scf.if %2 {
      %cst_26 = arith.constant 0xFF800000 : f32
      %35 = vector.broadcast %cst_26 : f32 to vector<16x1xf32>
      %c0_27 = arith.constant 0 : index
      %c0_28 = arith.constant 0 : index
      %36 = vector.load %arg8[%c0_27, %c0_28] : memref<16x1xf32, #tpu.memory_space<vmem>>, vector<16x1xf32>
      tpu.vector_store %arg8[%c0_27, %c0_28], %35 {strides = array<i32>} : memref<16x1xf32, #tpu.memory_space<vmem>>, vector<16x1xf32>,
      %cst_29 = arith.constant 0.000000e+00 : f32
      %37 = vector.broadcast %cst_29 : f32 to vector<16x1xf32>
      %c0_30 = arith.constant 0 : index
      %c0_31 = arith.constant 0 : index
      %38 = vector.load %arg9[%c0_30, %c0_31] : memref<16x1xf32, #tpu.memory_space<vmem>>, vector<16x1xf32>
      tpu.vector_store %arg9[%c0_30, %c0_31], %37 {strides = array<i32>} : memref<16x1xf32, #tpu.memory_space<vmem>>, vector<16x1xf32>,
      %cst_32 = arith.constant 0.000000e+00 : f32
      %39 = vector.broadcast %cst_32 : f32 to vector<16x128xf32>
      %c0_33 = arith.constant 0 : index
      %c0_34 = arith.constant 0 : index
      %40 = vector.load %arg10[%c0_33, %c0_34] : memref<16x128xf32, #tpu.memory_space<vmem>>, vector<16x128xf32>
      tpu.vector_store %arg10[%c0_33, %c0_34], %39 {strides = array<i32>} : memref<16x128xf32, #tpu.memory_space<vmem>>, vector<16x128xf32>,
    } else {
    }
    %c0 = arith.constant 0 : index
    %c0_1 = arith.constant 0 : index
    %c0_2 = arith.constant 0 : index
    %3 = vector.load %arg4[%c0, %c0_1, %c0_2] : memref<1x16x128xf32, #tpu.memory_space<vmem>>, vector<1x16x128xf32>
    %4 = vector.shape_cast %3 : vector<1x16x128xf32> to vector<16x128xf32>
    %c0_3 = arith.constant 0 : index
    %c0_4 = arith.constant 0 : index
    %c0_5 = arith.constant 0 : index
    %5 = vector.load %arg5[%c0_3, %c0_4, %c0_5] : memref<1x16x128xf32, #tpu.memory_space<vmem>>, vector<1x16x128xf32>
    %6 = vector.shape_cast %5 : vector<1x16x128xf32> to vector<16x128xf32>
    %cst = arith.constant dense<0.000000e+00> : vector<16x16xf32>
    %7 = tpu.matmul %4, %6, %cst {dimension_numbers = #tpu.dot_dimension_numbers<[1], [1], [0], [0], [0, 0, 1, 0], [], []>} : vector<16x128xf32>, vector<16x128xf32>, vector<16x16xf32> -> vector<16x16xf32>
    %c0_6 = arith.constant 0 : index
    %c0_7 = arith.constant 0 : index
    %8 = vector.load %arg8[%c0_6, %c0_7] : memref<16x1xf32, #tpu.memory_space<vmem>>, vector<16x1xf32>
    %cst_8 = arith.constant dense<0xFF800000> : vector<16xf32>
    %9 = vector.multi_reduction <maximumf>, %7, %cst_8 [1] : vector<16x16xf32> to vector<16xf32>
    %10 = vector.shape_cast %9 : vector<16xf32> to vector<16x1xf32>
    %11 = arith.maximumf %8, %10 : vector<16x1xf32>
    %12 = arith.subf %8, %11 : vector<16x1xf32>
    %13 = math.exp %12 : vector<16x1xf32>
    %14 = vector.broadcast %11 : vector<16x1xf32> to vector<16x16xf32>
    %15 = arith.subf %7, %14 : vector<16x16xf32>
    %16 = math.exp %15 : vector<16x16xf32>
    %cst_9 = arith.constant dense<0.000000e+00> : vector<16xf32>
    %17 = vector.multi_reduction <add>, %16, %cst_9 [1] : vector<16x16xf32> to vector<16xf32>
    %18 = vector.shape_cast %17 : vector<16xf32> to vector<16x1xf32>
    %c0_10 = arith.constant 0 : index
    %c0_11 = arith.constant 0 : index
    %19 = vector.load %arg9[%c0_10, %c0_11] : memref<16x1xf32, #tpu.memory_space<vmem>>, vector<16x1xf32>
    %20 = arith.mulf %13, %19 : vector<16x1xf32>
    %21 = arith.addf %20, %18 : vector<16x1xf32>
    %c0_12 = arith.constant 0 : index
    %c0_13 = arith.constant 0 : index
    %22 = vector.load %arg9[%c0_12, %c0_13] : memref<16x1xf32, #tpu.memory_space<vmem>>, vector<16x1xf32>
    tpu.vector_store %arg9[%c0_12, %c0_13], %21 {strides = array<i32>} : memref<16x1xf32, #tpu.memory_space<vmem>>, vector<16x1xf32>,
    %c0_14 = arith.constant 0 : index
    %c0_15 = arith.constant 0 : index
    %23 = vector.load %arg10[%c0_14, %c0_15] : memref<16x128xf32, #tpu.memory_space<vmem>>, vector<16x128xf32>
    %24 = vector.broadcast %13 : vector<16x1xf32> to vector<16x128xf32>
    %25 = arith.mulf %24, %23 : vector<16x128xf32>
    %c0_16 = arith.constant 0 : index
    %c0_17 = arith.constant 0 : index
    %c0_18 = arith.constant 0 : index
    %26 = vector.load %arg6[%c0_16, %c0_17, %c0_18] : memref<1x16x128xf32, #tpu.memory_space<vmem>>, vector<1x16x128xf32>
    %27 = vector.shape_cast %26 : vector<1x16x128xf32> to vector<16x128xf32>
    %cst_19 = arith.constant dense<0.000000e+00> : vector<16x128xf32>
    %28 = tpu.matmul %16, %27, %cst_19 {dimension_numbers = #tpu.dot_dimension_numbers<[1], [0], [0], [1], [0, 0, 1, 1], [], []>} : vector<16x16xf32>, vector<16x128xf32>, vector<16x128xf32> -> vector<16x128xf32>
    %29 = arith.addf %25, %28 : vector<16x128xf32>
    %c0_20 = arith.constant 0 : index
    %c0_21 = arith.constant 0 : index
    %30 = vector.load %arg10[%c0_20, %c0_21] : memref<16x128xf32, #tpu.memory_space<vmem>>, vector<16x128xf32>
    tpu.vector_store %arg10[%c0_20, %c0_21], %29 {strides = array<i32>} : memref<16x128xf32, #tpu.memory_space<vmem>>, vector<16x128xf32>,
    %c0_22 = arith.constant 0 : index
    %c0_23 = arith.constant 0 : index
    %31 = vector.load %arg8[%c0_22, %c0_23] : memref<16x1xf32, #tpu.memory_space<vmem>>, vector<16x1xf32>
    tpu.vector_store %arg8[%c0_22, %c0_23], %11 {strides = array<i32>} : memref<16x1xf32, #tpu.memory_space<vmem>>, vector<16x1xf32>,
    %c0_i32_24 = arith.constant 0 : i32
    %32 = arith.cmpi eq, %arg3, %c0_i32_24 : i32
    %33 = arith.extui %32 : i1 to i32
    %c0_i32_25 = arith.constant 0 : i32
    %34 = arith.cmpi ne, %33, %c0_i32_25 : i32
    scf.if %34 {
      %c0_26 = arith.constant 0 : index
      %c0_27 = arith.constant 0 : index
      %35 = vector.load %arg9[%c0_26, %c0_27] : memref<16x1xf32, #tpu.memory_space<vmem>>, vector<16x1xf32>
      %36 = tpu.reciprocal %35 : vector<16x1xf32> -> vector<16x1xf32>
      %c0_28 = arith.constant 0 : index
      %c0_29 = arith.constant 0 : index
      %37 = vector.load %arg10[%c0_28, %c0_29] : memref<16x128xf32, #tpu.memory_space<vmem>>, vector<16x128xf32>
      %38 = vector.broadcast %36 : vector<16x1xf32> to vector<16x128xf32>
      %39 = arith.mulf %37, %38 : vector<16x128xf32>
      %c0_30 = arith.constant 0 : index
      %c0_31 = arith.constant 0 : index
      %c0_32 = arith.constant 0 : index
      %40 = vector.load %arg7[%c0_30, %c0_31, %c0_32] : memref<1x16x128xf32, #tpu.memory_space<vmem>>, vector<1x16x128xf32>
      %41 = vector.shape_cast %40 : vector<1x16x128xf32> to vector<16x128xf32>
      %42 = vector.shape_cast %39 : vector<16x128xf32> to vector<1x16x128xf32>
      tpu.vector_store %arg7[%c0_30, %c0_31, %c0_32], %42 {strides = array<i32>} : memref<1x16x128xf32, #tpu.memory_space<vmem>>, vector<1x16x128xf32>,
    } else {
    }
    return
  }
  func.func @transform_0(%arg0: i32, %arg1: i32, %arg2: i32, %arg3: i32) -> (i32, i32, i32) {
    %c0_i32 = arith.constant 0 : i32
    return %arg0, %arg2, %arg1 : i32, i32, i32
  }
  func.func @transform_1(%arg0: i32, %arg1: i32, %arg2: i32, %arg3: i32) -> (i32, i32, i32) {
    %c2_i32 = arith.constant 2 : i32
    %0 = arith.addi %c2_i32, %arg1 : i32
    %c0_i32 = arith.constant 0 : i32
    return %arg0, %arg3, %0 : i32, i32, i32
  }
  func.func @transform_2(%arg0: i32, %arg1: i32, %arg2: i32, %arg3: i32) -> (i32, i32, i32) {
    %c4_i32 = arith.constant 4 : i32
    %0 = arith.addi %c4_i32, %arg1 : i32
    %c0_i32 = arith.constant 0 : i32
    return %arg0, %arg3, %0 : i32, i32, i32
  }
  func.func @transform_3(%arg0: i32, %arg1: i32, %arg2: i32, %arg3: i32) -> (i32, i32, i32) {
    %c0_i32 = arith.constant 0 : i32
    return %arg0, %arg2, %arg1 : i32, i32, i32
  }
}

module attributes {stable_mosaic.version = 11 : i64} {
  func.func @_qkv_proj_kernel(%arg0: i32, %arg1: i32, %arg2: memref<1x16x32xf32, #tpu.memory_space<vmem>>, %arg3: memref<32x768xf32, #tpu.memory_space<vmem>>, %arg4: memref<1x16x768xf32, #tpu.memory_space<vmem>>) attributes {dimension_semantics = [#tpu.dimension_semantics<parallel>, #tpu.dimension_semantics<parallel>], iteration_bounds = array<i64: 2, 1>, scalar_prefetch = 0 : i64, scratch_operands = 0 : i64, tpu.core_type = #tpu.core_type<tc>, window_params = [{transform_indices = @transform_0, window_bounds = array<i64: 1, 16, 32>}, {pipeline_mode = #tpu.pipeline_mode<synchronous>, transform_indices = @transform_1, window_bounds = array<i64: 32, 768>}, {transform_indices = @transform_2, window_bounds = array<i64: 1, 16, 768>}]} {
    %c0 = arith.constant 0 : index
    %c0_0 = arith.constant 0 : index
    %c0_1 = arith.constant 0 : index
    %0 = vector.load %arg2[%c0, %c0_0, %c0_1] : memref<1x16x32xf32, #tpu.memory_space<vmem>>, vector<1x16x32xf32>
    %1 = vector.shape_cast %0 : vector<1x16x32xf32> to vector<16x32xf32>
    %c0_2 = arith.constant 0 : index
    %c0_3 = arith.constant 0 : index
    %2 = vector.load %arg3[%c0_2, %c0_3] : memref<32x768xf32, #tpu.memory_space<vmem>>, vector<32x768xf32>
    %cst = arith.constant dense<0.000000e+00> : vector<16x768xf32>
    %3 = tpu.matmul %1, %2, %cst {dimension_numbers = #tpu.dot_dimension_numbers<[1], [0], [0], [1], [0, 0, 1, 1], [], []>} : vector<16x32xf32>, vector<32x768xf32>, vector<16x768xf32> -> vector<16x768xf32>
    %c0_4 = arith.constant 0 : index
    %c0_5 = arith.constant 0 : index
    %c0_6 = arith.constant 0 : index
    %4 = vector.load %arg4[%c0_4, %c0_5, %c0_6] : memref<1x16x768xf32, #tpu.memory_space<vmem>>, vector<1x16x768xf32>
    %5 = vector.shape_cast %4 : vector<1x16x768xf32> to vector<16x768xf32>
    %6 = vector.shape_cast %3 : vector<16x768xf32> to vector<1x16x768xf32>
    tpu.vector_store %arg4[%c0_4, %c0_5, %c0_6], %6 {strides = array<i32>} : memref<1x16x768xf32, #tpu.memory_space<vmem>>, vector<1x16x768xf32>,
    return
  }
  func.func @transform_0(%arg0: i32, %arg1: i32) -> (i32, i32, i32) {
    %c0_i32 = arith.constant 0 : i32
    %c0_i32_0 = arith.constant 0 : i32
    return %arg0, %arg1, %c0_i32 : i32, i32, i32
  }
  func.func @transform_1(%arg0: i32, %arg1: i32) -> (i32, i32) {
    %c0_i32 = arith.constant 0 : i32
    %c0_i32_0 = arith.constant 0 : i32
    %c0_i32_1 = arith.constant 0 : i32
    return %c0_i32, %c0_i32_0 : i32, i32
  }
  func.func @transform_2(%arg0: i32, %arg1: i32) -> (i32, i32, i32) {
    %c0_i32 = arith.constant 0 : i32
    %c0_i32_0 = arith.constant 0 : i32
    return %arg0, %arg1, %c0_i32 : i32, i32, i32
  }
}

module attributes {stable_mosaic.version = 11 : i64} {
  func.func @_out_proj_kernel(%arg0: i32, %arg1: i32, %arg2: memref<1x16x256xf32, #tpu.memory_space<vmem>>, %arg3: memref<256x32xf32, #tpu.memory_space<vmem>>, %arg4: memref<1x32xf32, #tpu.memory_space<vmem>>, %arg5: memref<1x16x32xf32, #tpu.memory_space<vmem>>) attributes {dimension_semantics = [#tpu.dimension_semantics<parallel>, #tpu.dimension_semantics<parallel>], iteration_bounds = array<i64: 2, 1>, scalar_prefetch = 0 : i64, scratch_operands = 0 : i64, tpu.core_type = #tpu.core_type<tc>, window_params = [{transform_indices = @transform_0, window_bounds = array<i64: 1, 16, 256>}, {pipeline_mode = #tpu.pipeline_mode<synchronous>, transform_indices = @transform_1, window_bounds = array<i64: 256, 32>}, {pipeline_mode = #tpu.pipeline_mode<synchronous>, transform_indices = @transform_2, window_bounds = array<i64: 1, 32>}, {transform_indices = @transform_3, window_bounds = array<i64: 1, 16, 32>}]} {
    %c0 = arith.constant 0 : index
    %c0_0 = arith.constant 0 : index
    %c0_1 = arith.constant 0 : index
    %0 = vector.load %arg2[%c0, %c0_0, %c0_1] : memref<1x16x256xf32, #tpu.memory_space<vmem>>, vector<1x16x256xf32>
    %1 = vector.shape_cast %0 : vector<1x16x256xf32> to vector<16x256xf32>
    %c0_2 = arith.constant 0 : index
    %c0_3 = arith.constant 0 : index
    %2 = vector.load %arg3[%c0_2, %c0_3] : memref<256x32xf32, #tpu.memory_space<vmem>>, vector<256x32xf32>
    %cst = arith.constant dense<0.000000e+00> : vector<16x32xf32>
    %3 = tpu.matmul %1, %2, %cst {dimension_numbers = #tpu.dot_dimension_numbers<[1], [0], [0], [1], [0, 0, 1, 1], [], []>} : vector<16x256xf32>, vector<256x32xf32>, vector<16x32xf32> -> vector<16x32xf32>
    %c0_4 = arith.constant 0 : index
    %c0_5 = arith.constant 0 : index
    %4 = vector.load %arg4[%c0_4, %c0_5] : memref<1x32xf32, #tpu.memory_space<vmem>>, vector<1x32xf32>
    %5 = vector.broadcast %4 : vector<1x32xf32> to vector<16x32xf32>
    %6 = arith.addf %3, %5 : vector<16x32xf32>
    %c0_6 = arith.constant 0 : index
    %c0_7 = arith.constant 0 : index
    %c0_8 = arith.constant 0 : index
    %7 = vector.load %arg5[%c0_6, %c0_7, %c0_8] : memref<1x16x32xf32, #tpu.memory_space<vmem>>, vector<1x16x32xf32>
    %8 = vector.shape_cast %7 : vector<1x16x32xf32> to vector<16x32xf32>
    %9 = vector.shape_cast %6 : vector<16x32xf32> to vector<1x16x32xf32>
    tpu.vector_store %arg5[%c0_6, %c0_7, %c0_8], %9 {strides = array<i32>} : memref<1x16x32xf32, #tpu.memory_space<vmem>>, vector<1x16x32xf32>,
    return
  }
  func.func @transform_0(%arg0: i32, %arg1: i32) -> (i32, i32, i32) {
    %c0_i32 = arith.constant 0 : i32
    %c0_i32_0 = arith.constant 0 : i32
    return %arg0, %arg1, %c0_i32 : i32, i32, i32
  }
  func.func @transform_1(%arg0: i32, %arg1: i32) -> (i32, i32) {
    %c0_i32 = arith.constant 0 : i32
    %c0_i32_0 = arith.constant 0 : i32
    %c0_i32_1 = arith.constant 0 : i32
    return %c0_i32, %c0_i32_0 : i32, i32
  }
  func.func @transform_2(%arg0: i32, %arg1: i32) -> (i32, i32) {
    %c0_i32 = arith.constant 0 : i32
    %c0_i32_0 = arith.constant 0 : i32
    %c0_i32_1 = arith.constant 0 : i32
    return %c0_i32, %c0_i32_0 : i32, i32
  }
  func.func @transform_3(%arg0: i32, %arg1: i32) -> (i32, i32, i32) {
    %c0_i32 = arith.constant 0 : i32
    %c0_i32_0 = arith.constant 0 : i32
    return %arg0, %arg1, %c0_i32 : i32, i32, i32
  }
}

</mosaic_0001>

<llo_original>
// kernel: attention_forward.4
$region0: #{attention_forward.4}
  #allocation0 [shape = 'u32[]', space=smem, size = 0x4, offset = 0x4, fixed_abs, tag = 'smem constant byte address 0x4 - core index']
  #allocation1 [shape = 'u32[72,128]{1,0:T(1,128)}', space=vmem, size = 0x9000, scoped, tag = 'internal scratch']
  #allocation2 [shape = 'f32[16,1]{1,0:T(8,128)}', space=vmem, size = 0x2000, scoped, tag = 'scratch operand']
  #allocation3 [shape = 'f32[16,1]{1,0:T(8,128)}', space=vmem, size = 0x2000, scoped, tag = 'scratch operand']
  #allocation4 [shape = 'f32[16,128]{1,0:T(8,128)}', space=vmem, size = 0x2000, scoped, tag = 'scratch operand']
  %s0 = inlined_call_operand.vmem [shape: f32[2,16,768], index: 0, kind: input, shape index: {}, may-alias: {0,1,2}]
  %s1 = inlined_call_operand.vmem [shape: f32[2,16,768], index: 1, kind: input, shape index: {}, may-alias: {0,1,2}]
  %s2 = inlined_call_operand.vmem [shape: f32[2,16,768], index: 2, kind: input, shape index: {}, may-alias: {0,1,2}]
  %s3 = inlined_call_operand.vmem [shape: f32[2,16,256], index: 3, kind: output, shape index: {}]
  %s4 = sld [smem:[#allocation0]]
  $region201: #{attention_forward.4} parent=0
    _
  %s6 = ssub.s32 1, %s4
  %s7 = scalar_select 0, %s6, %s4
  $region1: #{attention_forward.4} parent=0
    #allocation5 [shape = 'u8[16384]{0}', space=vmem, size = 0x4000, scoped, tag = 'input window, operand 0']
    #allocation6 [shape = 'u8[16384]{0}', space=vmem, size = 0x4000, scoped, tag = 'input window, operand 1']
    #allocation7 [shape = 'u8[16384]{0}', space=vmem, size = 0x4000, scoped, tag = 'input window, operand 2']
    #allocation8 [shape = 'u8[16384]{0}', space=vmem, size = 0x4000, scoped, tag = 'output window, operand 0']
    loop: start=0, step=1, limit=6
    $region2: #{attention_forward.4} parent=1 // loop_pre_header
      _
    $region3: #{attention_forward.4} parent=1 // loop_header
      %s9 = sphi 0, %s13
      %p10 = scmp.ge.s32.totalorder %s9, 6
      %s16 = sphi 0, %s42
      %s17 = sphi 0, %s38
      %s18 = sphi 0, %s34
      %s19 = sphi 0, %s30
      %s20 = sphi 0, %s16
      %s21 = sphi 0, %s17
      %s22 = sphi 0, %s18
      %s23 = sphi 0, %s19
      %s24 = sphi 0, %s20
      %s25 = sphi 0, %s21
      %s26 = sphi 0, %s22
      %s27 = sphi 0, %s23
      %s49 = sphi 0, %s51
      %s52 = sphi 0, %s49
      %s53 = sphi 0, %s52
      %s69 = sphi 0, %s53
      %s81 = sphi 0, %s83
      %s84 = sphi 0, %s81
      %s85 = sphi 0, %s84
      %s101 = sphi 0, %s85
      %s113 = sphi 0, %s115
      %s116 = sphi 0, %s113
      %s117 = sphi 0, %s116
      %s133 = sphi 0, %s117
      %s143 = sphi 0, %s145
      %s146 = sphi 0, %s143
      %s147 = sphi 0, %s146
      %s163 = sphi 0, %s147
    $region4: #{attention_forward.4} parent=1 // loop_header_branch
      %12 = sbr.rel (%p10) target = $region8
    $region5: #{attention_forward.4} parent=1 // loop_body
      %s14 = ssub.s32 %s9, 1
      %s15 = ssub.s32 %s9, 2
      %s28 = sadd.s32 1, %s19
      %p29 = scmp.ge.s32.totalorder %s28, 1
      %s30 = scalar_select %p29, 0, %s28
      %s31 = sadd.s32 1, %s18
      %s32 = scalar_select %p29, %s31, %s18
      %p33 = scmp.ge.s32.totalorder %s32, 1
      %s34 = scalar_select %p33, 0, %s32
      %s35 = sadd.s32 1, %s17
      %s36 = scalar_select %p33, %s35, %s17
      %p37 = scmp.ge.s32.totalorder %s36, 2
      %s38 = scalar_select %p37, 0, %s36
      %s39 = sadd.s32 1, %s16
      %s40 = scalar_select %p37, %s39, %s16
      %p41 = scmp.ge.s32.totalorder %s40, 2
      %s42 = scalar_select %p41, 0, %s40
      %s43 = ssub.s32 %s16, %s42
      %s44 = ssub.s32 %s18, %s34
      %s45 = sor.u32 %s43, %s44
      %s46 = ssub.s32 %s17, %s38
      %s47 = sor.u32 %s45, %s46
      %p48 = scmp.eq.s32.totalorder %s47, 0
      %s50 = sadd.s32 %s49, 1
      %s51 = scalar_select %p48, %s49, %s50
      %p54 = pneg %p48
      %p55 = scmp.eq.s32.totalorder %s9, 3
      %p56 = por %p54, %p55
      %p57 = scmp.ne.s32.totalorder %s49, %s52
      %p58 = scmp.eq.s32.totalorder %s9, 0
      %p59 = por %p57, %p58
      %p60 = scmp.ne.s32.totalorder %s49, %s52
      %p61 = scmp.eq.s32.totalorder %s14, 3
      %p62 = por %p60, %p61
      %p63 = scmp.ne.s32.totalorder %s52, %s53
      %p64 = scmp.eq.s32.totalorder %s14, 0
      %p65 = por %p63, %p64
      %p66 = scmp.ne.s32.totalorder %s52, %s53
      %p67 = scmp.eq.s32.totalorder %s15, 3
      %p68 = por %p66, %p67
      %p70 = scmp.ne.s32.totalorder %s53, %s69
      %p71 = scmp.eq.s32.totalorder %s15, 0
      %p72 = por %p70, %p71
      %s73 = sadd.s32 %s17, 2
      %s74 = sadd.s32 %s38, 2
      %s75 = ssub.s32 %s16, %s42
      %s76 = ssub.s32 %s19, %s30
      %s77 = sor.u32 %s75, %s76
      %s78 = ssub.s32 %s73, %s74
      %s79 = sor.u32 %s77, %s78
      %p80 = scmp.eq.s32.totalorder %s79, 0
      %s82 = sadd.s32 %s81, 1
      %s83 = scalar_select %p80, %s81, %s82
      %p86 = pneg %p80
      %p87 = scmp.eq.s32.totalorder %s9, 3
      %p88 = por %p86, %p87
      %p89 = scmp.ne.s32.totalorder %s81, %s84
      %p90 = scmp.eq.s32.totalorder %s9, 0
      %p91 = por %p89, %p90
      %p92 = scmp.ne.s32.totalorder %s81, %s84
      %p93 = scmp.eq.s32.totalorder %s14, 3
      %p94 = por %p92, %p93
      %p95 = scmp.ne.s32.totalorder %s84, %s85
      %p96 = scmp.eq.s32.totalorder %s14, 0
      %p97 = por %p95, %p96
      %p98 = scmp.ne.s32.totalorder %s84, %s85
      %p99 = scmp.eq.s32.totalorder %s15, 3
      %p100 = por %p98, %p99
      %p102 = scmp.ne.s32.totalorder %s85, %s101
      %p103 = scmp.eq.s32.totalorder %s15, 0
      %p104 = por %p102, %p103
      %s105 = sadd.s32 %s17, 4
      %s106 = sadd.s32 %s38, 4
      %s107 = ssub.s32 %s16, %s42
      %s108 = ssub.s32 %s19, %s30
      %s109 = sor.u32 %s107, %s108
      %s110 = ssub.s32 %s105, %s106
      %s111 = sor.u32 %s109, %s110
      %p112 = scmp.eq.s32.totalorder %s111, 0
      %s114 = sadd.s32 %s113, 1
      %s115 = scalar_select %p112, %s113, %s114
      %p118 = pneg %p112
      %p119 = scmp.eq.s32.totalorder %s9, 3
      %p120 = por %p118, %p119
      %p121 = scmp.ne.s32.totalorder %s113, %s116
      %p122 = scmp.eq.s32.totalorder %s9, 0
      %p123 = por %p121, %p122
      %p124 = scmp.ne.s32.totalorder %s113, %s116
      %p125 = scmp.eq.s32.totalorder %s14, 3
      %p126 = por %p124, %p125
      %p127 = scmp.ne.s32.totalorder %s116, %s117
      %p128 = scmp.eq.s32.totalorder %s14, 0
      %p129 = por %p127, %p128
      %p130 = scmp.ne.s32.totalorder %s116, %s117
      %p131 = scmp.eq.s32.totalorder %s15, 3
      %p132 = por %p130, %p131
      %p134 = scmp.ne.s32.totalorder %s117, %s133
      %p135 = scmp.eq.s32.totalorder %s15, 0
      %p136 = por %p134, %p135
      %s137 = ssub.s32 %s16, %s42
      %s138 = ssub.s32 %s18, %s34
      %s139 = sor.u32 %s137, %s138
      %s140 = ssub.s32 %s17, %s38
      %s141 = sor.u32 %s139, %s140
      %p142 = scmp.eq.s32.totalorder %s141, 0
      %s144 = sadd.s32 %s143, 1
      %s145 = scalar_select %p142, %s143, %s144
      %p148 = pneg %p142
      %p149 = scmp.eq.s32.totalorder %s9, 3
      %p150 = por %p148, %p149
      %p151 = scmp.ne.s32.totalorder %s143, %s146
      %p152 = scmp.eq.s32.totalorder %s9, 0
      %p153 = por %p151, %p152
      %p154 = scmp.ne.s32.totalorder %s143, %s146
      %p155 = scmp.eq.s32.totalorder %s14, 3
      %p156 = por %p154, %p155
      %p157 = scmp.ne.s32.totalorder %s146, %s147
      %p158 = scmp.eq.s32.totalorder %s14, 0
      %p159 = por %p157, %p158
      %p160 = scmp.ne.s32.totalorder %s146, %s147
      %p161 = scmp.eq.s32.totalorder %s15, 3
      %p162 = por %p160, %p161
      %p164 = scmp.ne.s32.totalorder %s147, %s163
      %p165 = scmp.eq.s32.totalorder %s15, 0
      %p166 = por %p164, %p165
      %p167 = scmp.le.s32.totalorder 1, %s9
      %p168 = scmp.lt.s32.totalorder %s9, 5
      %p169 = pnand %p167, %p168
      %p170 = pneg %p169
      // Predicated region
      $region9: #{attention_forward.4} parent=5 // pred_check
        _
      $region10: #{attention_forward.4} parent=5 // pred_check_branch
        %172 = sbr.rel (%p169) target = $region12
      $region11: #{attention_forward.4} parent=5 // pred_region
        %s173 = ssub.s32 %s9, 1
      $region12: #{attention_forward.4} parent=5 // pred_fallthru
        _
      %p174 = scmp.lt.s32.totalorder %s9, 4
      // Predicated region
      $region13: #{attention_forward.4} parent=5 // pred_check
        %p175 = pneg %p174
      $region14: #{attention_forward.4} parent=5 // pred_check_branch
        %177 = sbr.rel (%p175) target = $region16
      $region15: #{attention_forward.4} parent=5 // pred_region
        // Predicated region
        $region17: #{attention_forward.4} parent=15 // pred_check
          %p178 = pneg %p59
        $region18: #{attention_forward.4} parent=15 // pred_check_branch
          %180 = sbr.rel (%p178) target = $region20
        $region19: #{attention_forward.4} parent=15 // pred_region
          %s181 = sand.u32 %s49, 1
          %s182 = sand.u32 %s49, 1
          %s183 = smul.addr %s182, 16
          %s184 = scalar_lea.vmem [#allocation5], %s183
          %s185 = smul.u32 2, %s18
          %s186 = smul.addr %s185, 6
          %s187 = sadd.s32 %s17, %s186
          %s188 = smul.addr %s16, 12
          %s189 = sadd.s32 %s187, %s188
          %s190 = smul.addr %s189, 8
          %s191 = scalar_lea.vmem %s0, %s190
          // Predicated region
          $region21: #{attention_forward.4} parent=19 // pred_check
            _
          $region22: #{attention_forward.4} parent=19 // pred_check_branch
            %193 = sbr.rel (0) target = $region24
          $region23: #{attention_forward.4} parent=19 // pred_region
            // Predicated region
            $region25: #{attention_forward.4} parent=23 // pred_check
              _
            $region26: #{attention_forward.4} parent=23 // pred_check_branch
              %195 = sbr.rel (0) target = $region28
            $region27: #{attention_forward.4} parent=23 // pred_region
              // Predicated region
              $region40: #{attention_forward.4} parent=27 // pred_check
                _
              $region41: #{attention_forward.4} parent=27 // pred_check_branch
                %213 = sbr.rel (0) target = $region43
              $region42: #{attention_forward.4} parent=27 // pred_region
                loop: start=0, step=1, limit=1
                $region44: #{attention_forward.4} parent=42 // loop_pre_header
                  _
                $region45: #{attention_forward.4} parent=42 // loop_header
                  %s215 = sphi 0, %s219
                  %p216 = scmp.ge.s32.totalorder %s215, 1
                  %s220 = sphi %s191, %s191
                  %s221 = sphi %s184, %s184
                $region46: #{attention_forward.4} parent=42 // loop_header_branch
                  %218 = sbr.rel (%p216) target = $region50
                $region47: #{attention_forward.4} parent=42 // loop_body
                  %v222 = vld [vmem:[%s220] sm:$0xff]
                  %223 = vst [vmem:[%s221] sm:$0xff] %v222
                  %v224 = vld [vmem:[%s220 + $0x30] sm:$0xff]
                  %225 = vst [vmem:[%s221 + $0x8] sm:$0xff] %v224
                $region48: #{attention_forward.4} parent=42 // loop_footer
                  %s219 = sadd.s32 1, %s215
                $region49: #{attention_forward.4} parent=42 // loop_footer_branch
                  %214 = sbr.rel target = $region45
                $region50: #{attention_forward.4} parent=42 // loop_exit
                  _
              $region43: #{attention_forward.4} parent=27 // pred_fallthru
                _
              // Predicated region
              $region51: #{attention_forward.4} parent=27 // pred_check
                _
              $region52: #{attention_forward.4} parent=27 // pred_check_branch
                %227 = sbr.rel target = $region54
              $region53: #{attention_forward.4} parent=27 // pred_region
                _
              $region54: #{attention_forward.4} parent=27 // pred_fallthru
                _
            $region28: #{attention_forward.4} parent=23 // pred_fallthru
              _
            // Predicated region
            $region29: #{attention_forward.4} parent=23 // pred_check
              _
            $region30: #{attention_forward.4} parent=23 // pred_check_branch
              %197 = sbr.rel target = $region32
            $region31: #{attention_forward.4} parent=23 // pred_region
              %s199 = ssub.s32 256, 1
              loop: start=0, step=1, limit=1
              $region33: #{attention_forward.4} parent=31 // loop_pre_header
                _
              $region34: #{attention_forward.4} parent=31 // loop_header
                %s201 = sphi 0, %s205
                %p202 = scmp.ge.s32.totalorder %s201, 1
                %s206 = sphi %s191, %s191
                %s207 = sphi %s184, %s184
              $region35: #{attention_forward.4} parent=31 // loop_header_branch
                %204 = sbr.rel (%p202) target = $region39
              $region36: #{attention_forward.4} parent=31 // loop_body
                %v208 = vld [vmem:[%s206] sm:%s199]
                %209 = vst [vmem:[%s207] sm:%s199] %v208
                %v210 = vld [vmem:[%s206 + $0x30] sm:%s199]
                %211 = vst [vmem:[%s207 + $0x8] sm:%s199] %v210
              $region37: #{attention_forward.4} parent=31 // loop_footer
                %s205 = sadd.s32 1, %s201
              $region38: #{attention_forward.4} parent=31 // loop_footer_branch
                %200 = sbr.rel target = $region34
              $region39: #{attention_forward.4} parent=31 // loop_exit
                _
            $region32: #{attention_forward.4} parent=23 // pred_fallthru
              _
          $region24: #{attention_forward.4} parent=19 // pred_fallthru
            _
          %228 = vnop
        $region20: #{attention_forward.4} parent=15 // pred_fallthru
          _
        // Predicated region
        $region55: #{attention_forward.4} parent=15 // pred_check
          %p229 = pneg %p91
        $region56: #{attention_forward.4} parent=15 // pred_check_branch
          %231 = sbr.rel (%p229) target = $region58
        $region57: #{attention_forward.4} parent=15 // pred_region
          %s232 = sand.u32 %s81, 1
          %s233 = sand.u32 %s81, 1
          %s234 = smul.addr %s233, 16
          %s235 = scalar_lea.vmem [#allocation6], %s234
          %s236 = sadd.s32 %s17, 2
          %s237 = smul.u32 2, %s19
          %s238 = smul.addr %s237, 6
          %s239 = sadd.s32 %s236, %s238
          %s240 = smul.addr %s16, 12
          %s241 = sadd.s32 %s239, %s240
          %s242 = smul.addr %s241, 8
          %s243 = scalar_lea.vmem %s1, %s242
          // Predicated region
          $region59: #{attention_forward.4} parent=57 // pred_check
            _
          $region60: #{attention_forward.4} parent=57 // pred_check_branch
            %245 = sbr.rel (0) target = $region62
          $region61: #{attention_forward.4} parent=57 // pred_region
            // Predicated region
            $region63: #{attention_forward.4} parent=61 // pred_check
              _
            $region64: #{attention_forward.4} parent=61 // pred_check_branch
              %247 = sbr.rel (0) target = $region66
            $region65: #{attention_forward.4} parent=61 // pred_region
              // Predicated region
              $region78: #{attention_forward.4} parent=65 // pred_check
                _
              $region79: #{attention_forward.4} parent=65 // pred_check_branch
                %265 = sbr.rel (0) target = $region81
              $region80: #{attention_forward.4} parent=65 // pred_region
                loop: start=0, step=1, limit=1
                $region82: #{attention_forward.4} parent=80 // loop_pre_header
                  _
                $region83: #{attention_forward.4} parent=80 // loop_header
                  %s267 = sphi 0, %s271
                  %p268 = scmp.ge.s32.totalorder %s267, 1
                  %s272 = sphi %s243, %s243
                  %s273 = sphi %s235, %s235
                $region84: #{attention_forward.4} parent=80 // loop_header_branch
                  %270 = sbr.rel (%p268) target = $region88
                $region85: #{attention_forward.4} parent=80 // loop_body
                  %v274 = vld [vmem:[%s272] sm:$0xff]
                  %275 = vst [vmem:[%s273] sm:$0xff] %v274
                  %v276 = vld [vmem:[%s272 + $0x30] sm:$0xff]
                  %277 = vst [vmem:[%s273 + $0x8] sm:$0xff] %v276
                $region86: #{attention_forward.4} parent=80 // loop_footer
                  %s271 = sadd.s32 1, %s267
                $region87: #{attention_forward.4} parent=80 // loop_footer_branch
                  %266 = sbr.rel target = $region83
                $region88: #{attention_forward.4} parent=80 // loop_exit
                  _
              $region81: #{attention_forward.4} parent=65 // pred_fallthru
                _
              // Predicated region
              $region89: #{attention_forward.4} parent=65 // pred_check
                _
              $region90: #{attention_forward.4} parent=65 // pred_check_branch
                %279 = sbr.rel target = $region92
              $region91: #{attention_forward.4} parent=65 // pred_region
                _
              $region92: #{attention_forward.4} parent=65 // pred_fallthru
                _
            $region66: #{attention_forward.4} parent=61 // pred_fallthru
              _
            // Predicated region
            $region67: #{attention_forward.4} parent=61 // pred_check
              _
            $region68: #{attention_forward.4} parent=61 // pred_check_branch
              %249 = sbr.rel target = $region70
            $region69: #{attention_forward.4} parent=61 // pred_region
              %s251 = ssub.s32 256, 1
              loop: start=0, step=1, limit=1
              $region71: #{attention_forward.4} parent=69 // loop_pre_header
                _
              $region72: #{attention_forward.4} parent=69 // loop_header
                %s253 = sphi 0, %s257
                %p254 = scmp.ge.s32.totalorder %s253, 1
                %s258 = sphi %s243, %s243
                %s259 = sphi %s235, %s235
              $region73: #{attention_forward.4} parent=69 // loop_header_branch
                %256 = sbr.rel (%p254) target = $region77
              $region74: #{attention_forward.4} parent=69 // loop_body
                %v260 = vld [vmem:[%s258] sm:%s251]
                %261 = vst [vmem:[%s259] sm:%s251] %v260
                %v262 = vld [vmem:[%s258 + $0x30] sm:%s251]
                %263 = vst [vmem:[%s259 + $0x8] sm:%s251] %v262
              $region75: #{attention_forward.4} parent=69 // loop_footer
                %s257 = sadd.s32 1, %s253
              $region76: #{attention_forward.4} parent=69 // loop_footer_branch
                %252 = sbr.rel target = $region72
              $region77: #{attention_forward.4} parent=69 // loop_exit
                _
            $region70: #{attention_forward.4} parent=61 // pred_fallthru
              _
          $region62: #{attention_forward.4} parent=57 // pred_fallthru
            _
          %280 = vnop
        $region58: #{attention_forward.4} parent=15 // pred_fallthru
          _
        // Predicated region
        $region93: #{attention_forward.4} parent=15 // pred_check
          %p281 = pneg %p123
        $region94: #{attention_forward.4} parent=15 // pred_check_branch
          %283 = sbr.rel (%p281) target = $region96
        $region95: #{attention_forward.4} parent=15 // pred_region
          %s284 = sand.u32 %s113, 1
          %s285 = sand.u32 %s113, 1
          %s286 = smul.addr %s285, 16
          %s287 = scalar_lea.vmem [#allocation7], %s286
          %s288 = sadd.s32 %s17, 4
          %s289 = smul.u32 2, %s19
          %s290 = smul.addr %s289, 6
          %s291 = sadd.s32 %s288, %s290
          %s292 = smul.addr %s16, 12
          %s293 = sadd.s32 %s291, %s292
          %s294 = smul.addr %s293, 8
          %s295 = scalar_lea.vmem %s2, %s294
          // Predicated region
          $region97: #{attention_forward.4} parent=95 // pred_check
            _
          $region98: #{attention_forward.4} parent=95 // pred_check_branch
            %297 = sbr.rel (0) target = $region100
          $region99: #{attention_forward.4} parent=95 // pred_region
            // Predicated region
            $region101: #{attention_forward.4} parent=99 // pred_check
              _
            $region102: #{attention_forward.4} parent=99 // pred_check_branch
              %299 = sbr.rel (0) target = $region104
            $region103: #{attention_forward.4} parent=99 // pred_region
              // Predicated region
              $region116: #{attention_forward.4} parent=103 // pred_check
                _
              $region117: #{attention_forward.4} parent=103 // pred_check_branch
                %317 = sbr.rel (0) target = $region119
              $region118: #{attention_forward.4} parent=103 // pred_region
                loop: start=0, step=1, limit=1
                $region120: #{attention_forward.4} parent=118 // loop_pre_header
                  _
                $region121: #{attention_forward.4} parent=118 // loop_header
                  %s319 = sphi 0, %s323
                  %p320 = scmp.ge.s32.totalorder %s319, 1
                  %s324 = sphi %s295, %s295
                  %s325 = sphi %s287, %s287
                $region122: #{attention_forward.4} parent=118 // loop_header_branch
                  %322 = sbr.rel (%p320) target = $region126
                $region123: #{attention_forward.4} parent=118 // loop_body
                  %v326 = vld [vmem:[%s324] sm:$0xff]
                  %327 = vst [vmem:[%s325] sm:$0xff] %v326
                  %v328 = vld [vmem:[%s324 + $0x30] sm:$0xff]
                  %329 = vst [vmem:[%s325 + $0x8] sm:$0xff] %v328
                $region124: #{attention_forward.4} parent=118 // loop_footer
                  %s323 = sadd.s32 1, %s319
                $region125: #{attention_forward.4} parent=118 // loop_footer_branch
                  %318 = sbr.rel target = $region121
                $region126: #{attention_forward.4} parent=118 // loop_exit
                  _
              $region119: #{attention_forward.4} parent=103 // pred_fallthru
                _
              // Predicated region
              $region127: #{attention_forward.4} parent=103 // pred_check
                _
              $region128: #{attention_forward.4} parent=103 // pred_check_branch
                %331 = sbr.rel target = $region130
              $region129: #{attention_forward.4} parent=103 // pred_region
                _
              $region130: #{attention_forward.4} parent=103 // pred_fallthru
                _
            $region104: #{attention_forward.4} parent=99 // pred_fallthru
              _
            // Predicated region
            $region105: #{attention_forward.4} parent=99 // pred_check
              _
            $region106: #{attention_forward.4} parent=99 // pred_check_branch
              %301 = sbr.rel target = $region108
            $region107: #{attention_forward.4} parent=99 // pred_region
              %s303 = ssub.s32 256, 1
              loop: start=0, step=1, limit=1
              $region109: #{attention_forward.4} parent=107 // loop_pre_header
                _
              $region110: #{attention_forward.4} parent=107 // loop_header
                %s305 = sphi 0, %s309
                %p306 = scmp.ge.s32.totalorder %s305, 1
                %s310 = sphi %s295, %s295
                %s311 = sphi %s287, %s287
              $region111: #{attention_forward.4} parent=107 // loop_header_branch
                %308 = sbr.rel (%p306) target = $region115
              $region112: #{attention_forward.4} parent=107 // loop_body
                %v312 = vld [vmem:[%s310] sm:%s303]
                %313 = vst [vmem:[%s311] sm:%s303] %v312
                %v314 = vld [vmem:[%s310 + $0x30] sm:%s303]
                %315 = vst [vmem:[%s311 + $0x8] sm:%s303] %v314
              $region113: #{attention_forward.4} parent=107 // loop_footer
                %s309 = sadd.s32 1, %s305
              $region114: #{attention_forward.4} parent=107 // loop_footer_branch
                %304 = sbr.rel target = $region110
              $region115: #{attention_forward.4} parent=107 // loop_exit
                _
            $region108: #{attention_forward.4} parent=99 // pred_fallthru
              _
          $region100: #{attention_forward.4} parent=95 // pred_fallthru
            _
          %332 = vnop
        $region96: #{attention_forward.4} parent=15 // pred_fallthru
          _
      $region16: #{attention_forward.4} parent=5 // pred_fallthru
        _
      %p333 = scmp.le.s32.totalorder 1, %s9
      %p334 = scmp.lt.s32.totalorder %s9, 5
      %p335 = pnand %p333, %p334
      %p336 = pneg %p335
      // Predicated region
      $region131: #{attention_forward.4} parent=5 // pred_check
        _
      $region132: #{attention_forward.4} parent=5 // pred_check_branch
        %338 = sbr.rel (%p335) target = $region134
      $region133: #{attention_forward.4} parent=5 // pred_region
        %s339 = ssub.s32 %s9, 1
        %s340 = sand.u32 %s52, 1
        %s341 = sand.u32 %s52, 1
        %s342 = smul.addr %s341, 16
        %s343 = scalar_lea.vmem [#allocation5], %s342
        // Predicated region
        $region135: #{attention_forward.4} parent=133 // pred_check
          %p344 = pneg %p65
        $region136: #{attention_forward.4} parent=133 // pred_check_branch
          %346 = sbr.rel (%p344) target = $region138
        $region137: #{attention_forward.4} parent=133 // pred_region
          _
        $region138: #{attention_forward.4} parent=133 // pred_fallthru
          _
        %s347 = sand.u32 %s84, 1
        %s348 = sand.u32 %s84, 1
        %s349 = smul.addr %s348, 16
        %s350 = scalar_lea.vmem [#allocation6], %s349
        // Predicated region
        $region139: #{attention_forward.4} parent=133 // pred_check
          %p351 = pneg %p97
        $region140: #{attention_forward.4} parent=133 // pred_check_branch
          %353 = sbr.rel (%p351) target = $region142
        $region141: #{attention_forward.4} parent=133 // pred_region
          _
        $region142: #{attention_forward.4} parent=133 // pred_fallthru
          _
        %s354 = sand.u32 %s116, 1
        %s355 = sand.u32 %s116, 1
        %s356 = smul.addr %s355, 16
        %s357 = scalar_lea.vmem [#allocation7], %s356
        // Predicated region
        $region143: #{attention_forward.4} parent=133 // pred_check
          %p358 = pneg %p129
        $region144: #{attention_forward.4} parent=133 // pred_check_branch
          %360 = sbr.rel (%p358) target = $region146
        $region145: #{attention_forward.4} parent=133 // pred_region
          _
        $region146: #{attention_forward.4} parent=133 // pred_fallthru
          _
        %s361 = sand.u32 %s52, 1
        %s362 = sand.u32 %s52, 1
        %s363 = smul.addr %s362, 16
        %s364 = scalar_lea.vmem [#allocation5], %s363
        %p365 = pneg %p65
        %p366 = pneg %p62
        %s367 = sand.u32 %s84, 1
        %s368 = sand.u32 %s84, 1
        %s369 = smul.addr %s368, 16
        %s370 = scalar_lea.vmem [#allocation6], %s369
        %p371 = pneg %p97
        %p372 = pneg %p94
        %s373 = sand.u32 %s116, 1
        %s374 = sand.u32 %s116, 1
        %s375 = smul.addr %s374, 16
        %s376 = scalar_lea.vmem [#allocation7], %s375
        %p377 = pneg %p129
        %p378 = pneg %p126
        %p379 = pneg %p159
        %p380 = pneg %p156
        %s381 = sand.u32 %s146, 1
        %s382 = sand.u32 %s146, 1
        %s383 = smul.addr %s382, 16
        %s384 = scalar_lea.vmem [#allocation8], %s383
        %s385 = smul.u32 2, %s22
        %s386 = sadd.s32 %s21, 2
        %s387 = smul.u32 2, %s23
        %s388 = sadd.s32 %s21, 4
        %s389 = smul.u32 2, %s23
        %s390 = smul.u32 2, %s22
        %p391 = scmp.eq.s32.totalorder %s23, 0
        // Predicated region
        $region147: #{attention_forward.4} parent=133 // pred_check
          %p392 = pneg %p391
        $region148: #{attention_forward.4} parent=133 // pred_check_branch
          %394 = sbr.rel (%p392) target = $region150
        $region149: #{attention_forward.4} parent=133 // pred_region
          %vm395 = vcmask 7168
          %396 = vst.msk [vmem:[#allocation2] sm:$0xff] %vm395, -inf
          %397 = vst.msk [vmem:[#allocation2 + $0x8] sm:$0xff] %vm395, -inf
          %398 = vst.msk [vmem:[#allocation3] sm:$0xff] %vm395, 0.0
          %399 = vst.msk [vmem:[#allocation3 + $0x8] sm:$0xff] %vm395, 0.0
          %400 = vst [vmem:[#allocation4] sm:$0xff] 0.0
          %401 = vst [vmem:[#allocation4 + $0x8] sm:$0xff] 0.0
        $region150: #{attention_forward.4} parent=133 // pred_fallthru
          _
        %v402 = vld [vmem:[%s343] sm:$0xff]
        %v403 = vld [vmem:[%s343 + $0x8] sm:$0xff]
        %v404 = vld [vmem:[%s350] sm:$0xff]
        %v405 = vld [vmem:[%s350 + $0x8] sm:$0xff]
        %406 = vmatpush.xpose.msra.mxu0 0.0
        %407 = vmatpush.xpose.msra.mxu0 0.0
        %408 = vmatpush.xpose.msra.mxu0 0.0
        %409 = vmatpush.xpose.msra.mxu0 0.0
        %410 = vmatpush.xpose.msra.mxu0 0.0
        %411 = vmatpush.xpose.msra.mxu0 0.0
        %412 = vmatpush.xpose.msra.mxu0 0.0
        %413 = vmatpush.xpose.msra.mxu0 0.0
        %414 = vmatpush.xpose.msra.mxu0 0.0
        %415 = vmatpush.xpose.msra.mxu0 0.0
        %416 = vmatpush.xpose.msra.mxu0 0.0
        %417 = vmatpush.xpose.msra.mxu0 0.0
        %418 = vmatpush.xpose.msra.mxu0 0.0
        %419 = vmatpush.xpose.msra.mxu0 0.0
        %420 = vmatpush.xpose.msra.mxu0 %v405
        %421 = vmatpush.xpose.msra.mxu0 %v404
        %422 = vmatmul.f32.gmra.mxu0 %v402
        %v423 = vpop.f32.mrf.mxu0
        %v424 = vadd.f32 0.0, %v423
        %425 = vmatmul.f32.gmra.mxu0 %v403
        %v426 = vpop.f32.mrf.mxu0
        %v427 = vadd.f32 0.0, %v426
        %428 = vdwg.mxu0
        %v429 = vld [vmem:[#allocation2] sm:$0xff]
        %v430 = vld [vmem:[#allocation2 + $0x8] sm:$0xff]
        %vm431 = vcmask 130048
        %v432 = vsel %vm431, %v424, -inf
        %433 = vmax.xlane.f32.xlu0 %v432
        %v434 = vpop.xlane.xlu0 %433
        %v435 = vsel %vm431, %v427, -inf
        %436 = vmax.xlane.f32.xlu0 %v435
        %v437 = vpop.xlane.xlu0 %436
        %v438 = vmax.f32 %v429, %v434
        %v439 = vmax.f32 %v430, %v437
        %v440 = vsub.f32 %v429, %v438
        %v441 = vsub.f32 %v430, %v439
        %v442 = vmul.f32 %v440, 1.442695
        %v443 = vpow.pop %v442
        %v444 = vmul.f32 %v441, 1.442695
        %v445 = vpow.pop %v444
        %447 = vset.pattern.permute.xlu0 0
        %448 = vperm.xlu0 %447, %v438
        %v449 = vpop.permute.xlu0 %448
        %452 = vset.pattern.permute.xlu0 0
        %453 = vperm.xlu0 %452, %v439
        %v454 = vpop.permute.xlu0 %453
        %v456 = vsub.f32 %v424, %v449
        %v457 = vsub.f32 %v427, %v454
        %v458 = vmul.f32 %v456, 1.442695
        %v459 = vpow.pop %v458
        %v460 = vmul.f32 %v457, 1.442695
        %v461 = vpow.pop %v460
        %v462 = vsel %vm431, %v459, 0.0
        %463 = vadd.xlane.f32.xlu0 %v462
        %v464 = vpop.xlane.xlu0 %463
        %v465 = vsel %vm431, %v461, 0.0
        %466 = vadd.xlane.f32.xlu0 %v465
        %v467 = vpop.xlane.xlu0 %466
        %v468 = vld [vmem:[#allocation3] sm:$0xff]
        %v469 = vld [vmem:[#allocation3 + $0x8] sm:$0xff]
        %v470 = vmul.f32 %v443, %v468
        %v471 = vmul.f32 %v445, %v469
        %v472 = vadd.f32 %v470, %v464
        %v473 = vadd.f32 %v471, %v467
        %vm474 = vcmask 7168
        %475 = vst.msk [vmem:[#allocation3] sm:$0xff] %vm474, %v472
        %476 = vst.msk [vmem:[#allocation3 + $0x8] sm:$0xff] %vm474, %v473
        %v477 = vld [vmem:[#allocation4] sm:$0xff]
        %v478 = vld [vmem:[#allocation4 + $0x8] sm:$0xff]
        %480 = vset.pattern.permute.xlu0 0
        %481 = vperm.xlu0 %480, %v443
        %v482 = vpop.permute.xlu0 %481
        %485 = vset.pattern.permute.xlu0 0
        %486 = vperm.xlu0 %485, %v445
        %v487 = vpop.permute.xlu0 %486
        %v489 = vmul.f32 %v482, %v477
        %v490 = vmul.f32 %v487, %v478
        %v491 = vld [vmem:[%s357] sm:$0xff]
        %v492 = vld [vmem:[%s357 + $0x8] sm:$0xff]
        %v494 = vsel %vm431, %v459, 0
        %v497 = vsel %vm431, %v461, 0
        %499 = vmatpush.msra.mxu0 0.0
        %500 = vmatpush.msra.mxu0 0.0
        %501 = vmatpush.msra.mxu0 0.0
        %502 = vmatpush.msra.mxu0 0.0
        %503 = vmatpush.msra.mxu0 0.0
        %504 = vmatpush.msra.mxu0 0.0
        %505 = vmatpush.msra.mxu0 0.0
        %506 = vmatpush.msra.mxu0 0.0
        %507 = vmatpush.msra.mxu0 0.0
        %508 = vmatpush.msra.mxu0 0.0
        %509 = vmatpush.msra.mxu0 0.0
        %510 = vmatpush.msra.mxu0 0.0
        %511 = vmatpush.msra.mxu0 0.0
        %512 = vmatpush.msra.mxu0 0.0
        %513 = vmatpush.msra.mxu0 %v492
        %514 = vmatpush.msra.mxu0 %v491
        %515 = vmatmul.f32.gmra.mxu0 %v494
        %v516 = vpop.f32.mrf.mxu0
        %v517 = vadd.f32 0.0, %v516
        %518 = vmatmul.f32.gmra.mxu0 %v497
        %v519 = vpop.f32.mrf.mxu0
        %v520 = vadd.f32 0.0, %v519
        %521 = vdwg.mxu0
        %v522 = vadd.f32 %v489, %v517
        %v523 = vadd.f32 %v490, %v520
        %524 = vst [vmem:[#allocation4] sm:$0xff] %v522
        %525 = vst [vmem:[#allocation4 + $0x8] sm:$0xff] %v523
        %526 = vst.msk [vmem:[#allocation2] sm:$0xff] %vm474, %v438
        %527 = vst.msk [vmem:[#allocation2 + $0x8] sm:$0xff] %vm474, %v439
        // Predicated region
        $region151: #{attention_forward.4} parent=133 // pred_check
          %p528 = pneg %p391
        $region152: #{attention_forward.4} parent=133 // pred_check_branch
          %530 = sbr.rel (%p528) target = $region154
        $region153: #{attention_forward.4} parent=133 // pred_region
          %v531 = vld [vmem:[#allocation3] sm:$0xff]
          %v532 = vld [vmem:[#allocation3 + $0x8] sm:$0xff]
          %v533 = vrcp.pop %v531
          %v534 = vmul.f32 %v531, %v533
          %v535 = vsub.f32 1.0, %v534
          %v536 = vmul.f32 %v533, %v535
          %v537 = vadd.f32 %v533, %v536
          %vm538 = vweird.f32 %v531
          %vm539 = vweird.f32 %v533
          %vm540 = vmor %vm538, %vm539
          %v541 = vsel %vm540, %v533, %v537
          %v542 = vand.u32 2147483647, %v531
          %vm543 = vcmp.eq.f32.partialorder %v542, 8.507059e+37
          %v544 = vand.u32 %v531, 2147483648
          %v545 = vor.u32 1.1754944e-38, %v544
          %v546 = vsel %vm543, %v545, %v541
          %v547 = vrcp.pop %v532
          %v548 = vmul.f32 %v532, %v547
          %v549 = vsub.f32 1.0, %v548
          %v550 = vmul.f32 %v547, %v549
          %v551 = vadd.f32 %v547, %v550
          %vm552 = vweird.f32 %v532
          %vm553 = vweird.f32 %v547
          %vm554 = vmor %vm552, %vm553
          %v555 = vsel %vm554, %v547, %v551
          %v556 = vand.u32 2147483647, %v532
          %vm557 = vcmp.eq.f32.partialorder %v556, 8.507059e+37
          %v558 = vand.u32 %v532, 2147483648
          %v559 = vor.u32 1.1754944e-38, %v558
          %v560 = vsel %vm557, %v559, %v555
          %v561 = vld [vmem:[#allocation4] sm:$0xff]
          %v562 = vld [vmem:[#allocation4 + $0x8] sm:$0xff]
          %564 = vset.pattern.permute.xlu0 0
          %565 = vperm.xlu0 %564, %v546
          %v566 = vpop.permute.xlu0 %565
          %569 = vset.pattern.permute.xlu0 0
          %570 = vperm.xlu0 %569, %v560
          %v571 = vpop.permute.xlu0 %570
          %v573 = vmul.f32 %v561, %v566
          %v574 = vmul.f32 %v562, %v571
          %575 = vst [vmem:[%s384] sm:$0xff] %v573
          %576 = vst [vmem:[%s384 + $0x8] sm:$0xff] %v574
        $region154: #{attention_forward.4} parent=133 // pred_fallthru
          _
        %s577 = sand.u32 %s146, 1
        %s578 = sand.u32 %s146, 1
        %s579 = smul.addr %s578, 16
        %s580 = scalar_lea.vmem [#allocation8], %s579
        // Predicated region
        $region155: #{attention_forward.4} parent=133 // pred_check
          %p581 = pneg %p156
        $region156: #{attention_forward.4} parent=133 // pred_check_branch
          %583 = sbr.rel (%p581) target = $region158
        $region157: #{attention_forward.4} parent=133 // pred_region
          %s584 = smul.u32 2, %s22
          %s585 = smul.addr %s584, 2
          %s586 = sadd.s32 %s21, %s585
          %s587 = smul.addr %s20, 4
          %s588 = sadd.s32 %s586, %s587
          %s589 = smul.addr %s588, 8
          %s590 = scalar_lea.vmem %s3, %s589
          // Predicated region
          $region159: #{attention_forward.4} parent=157 // pred_check
            _
          $region160: #{attention_forward.4} parent=157 // pred_check_branch
            %592 = sbr.rel (0) target = $region162
          $region161: #{attention_forward.4} parent=157 // pred_region
            // Predicated region
            $region163: #{attention_forward.4} parent=161 // pred_check
              _
            $region164: #{attention_forward.4} parent=161 // pred_check_branch
              %594 = sbr.rel (0) target = $region166
            $region165: #{attention_forward.4} parent=161 // pred_region
              // Predicated region
              $region178: #{attention_forward.4} parent=165 // pred_check
                _
              $region179: #{attention_forward.4} parent=165 // pred_check_branch
                %612 = sbr.rel (0) target = $region181
              $region180: #{attention_forward.4} parent=165 // pred_region
                loop: start=0, step=1, limit=1
                $region182: #{attention_forward.4} parent=180 // loop_pre_header
                  _
                $region183: #{attention_forward.4} parent=180 // loop_header
                  %s614 = sphi 0, %s618
                  %p615 = scmp.ge.s32.totalorder %s614, 1
                  %s619 = sphi %s580, %s580
                  %s620 = sphi %s590, %s590
                $region184: #{attention_forward.4} parent=180 // loop_header_branch
                  %617 = sbr.rel (%p615) target = $region188
                $region185: #{attention_forward.4} parent=180 // loop_body
                  %v621 = vld [vmem:[%s619] sm:$0xff]
                  %622 = vst [vmem:[%s620] sm:$0xff] %v621
                  %v623 = vld [vmem:[%s619 + $0x8] sm:$0xff]
                  %624 = vst [vmem:[%s620 + $0x10] sm:$0xff] %v623
                $region186: #{attention_forward.4} parent=180 // loop_footer
                  %s618 = sadd.s32 1, %s614
                $region187: #{attention_forward.4} parent=180 // loop_footer_branch
                  %613 = sbr.rel target = $region183
                $region188: #{attention_forward.4} parent=180 // loop_exit
                  _
              $region181: #{attention_forward.4} parent=165 // pred_fallthru
                _
              // Predicated region
              $region189: #{attention_forward.4} parent=165 // pred_check
                _
              $region190: #{attention_forward.4} parent=165 // pred_check_branch
                %626 = sbr.rel target = $region192
              $region191: #{attention_forward.4} parent=165 // pred_region
                _
              $region192: #{attention_forward.4} parent=165 // pred_fallthru
                _
            $region166: #{attention_forward.4} parent=161 // pred_fallthru
              _
            // Predicated region
            $region167: #{attention_forward.4} parent=161 // pred_check
              _
            $region168: #{attention_forward.4} parent=161 // pred_check_branch
              %596 = sbr.rel target = $region170
            $region169: #{attention_forward.4} parent=161 // pred_region
              %s598 = ssub.s32 256, 1
              loop: start=0, step=1, limit=1
              $region171: #{attention_forward.4} parent=169 // loop_pre_header
                _
              $region172: #{attention_forward.4} parent=169 // loop_header
                %s600 = sphi 0, %s604
                %p601 = scmp.ge.s32.totalorder %s600, 1
                %s605 = sphi %s580, %s580
                %s606 = sphi %s590, %s590
              $region173: #{attention_forward.4} parent=169 // loop_header_branch
                %603 = sbr.rel (%p601) target = $region177
              $region174: #{attention_forward.4} parent=169 // loop_body
                %v607 = vld [vmem:[%s605] sm:%s598]
                %608 = vst [vmem:[%s606] sm:%s598] %v607
                %v609 = vld [vmem:[%s605 + $0x8] sm:%s598]
                %610 = vst [vmem:[%s606 + $0x10] sm:%s598] %v609
              $region175: #{attention_forward.4} parent=169 // loop_footer
                %s604 = sadd.s32 1, %s600
              $region176: #{attention_forward.4} parent=169 // loop_footer_branch
                %599 = sbr.rel target = $region172
              $region177: #{attention_forward.4} parent=169 // loop_exit
                _
            $region170: #{attention_forward.4} parent=161 // pred_fallthru
              _
          $region162: #{attention_forward.4} parent=157 // pred_fallthru
            _
          %627 = vnop
        $region158: #{attention_forward.4} parent=133 // pred_fallthru
          _
      $region134: #{attention_forward.4} parent=5 // pred_fallthru
        _
      %p628 = scmp.le.s32.totalorder 2, %s9
      // Predicated region
      $region193: #{attention_forward.4} parent=5 // pred_check
        %p629 = pneg %p628
      $region194: #{attention_forward.4} parent=5 // pred_check_branch
        %631 = sbr.rel (%p629) target = $region196
      $region195: #{attention_forward.4} parent=5 // pred_region
        %s632 = ssub.s32 %s9, 2
        // Predicated region
        $region197: #{attention_forward.4} parent=195 // pred_check
          %p633 = pneg %p162
        $region198: #{attention_forward.4} parent=195 // pred_check_branch
          %635 = sbr.rel (%p633) target = $region200
        $region199: #{attention_forward.4} parent=195 // pred_region
          %s636 = sand.u32 %s147, 1
          %s637 = sand.u32 %s147, 1
          %s638 = smul.addr %s637, 16
          %s639 = scalar_lea.vmem [#allocation8], %s638
        $region200: #{attention_forward.4} parent=195 // pred_fallthru
          _
      $region196: #{attention_forward.4} parent=5 // pred_fallthru
        _
    $region6: #{attention_forward.4} parent=1 // loop_footer
      %s13 = sadd.s32 1, %s9
    $region7: #{attention_forward.4} parent=1 // loop_footer_branch
      %8 = sbr.rel target = $region3
    $region8: #{attention_forward.4} parent=1 // loop_exit
      _

// kernel: attention_forward.3
$region0: #{attention_forward.3}
  #allocation0 [shape = 'u32[]', space=smem, size = 0x4, offset = 0x4, fixed_abs, tag = 'smem constant byte address 0x4 - core index']
  #allocation1 [shape = 'u32[72,128]{1,0:T(1,128)}', space=vmem, size = 0x9000, scoped, tag = 'internal scratch']
  %s0 = inlined_call_operand.vmem [shape: f32[2,16,32], index: 0, kind: input, shape index: {}]
  %s1 = inlined_call_operand.vmem [shape: f32[32,768], index: 1, kind: input, shape index: {}]
  %s2 = inlined_call_operand.vmem [shape: f32[2,16,768], index: 2, kind: output, shape index: {}]
  %s3 = sld [smem:[#allocation0]]
  $region41: #{attention_forward.3} parent=0
    _
  %s5 = ssub.s32 1, %s3
  %s6 = scalar_select 0, %s5, %s3
  loop: start=0, step=1, limit=4
  $region2: #{attention_forward.3} parent=0 // loop_pre_header
    _
  $region3: #{attention_forward.3} parent=0 // loop_header
    %s8 = sphi 0, %s12
    %p9 = scmp.ge.s32.totalorder %s8, 4
    %s15 = sphi 0, %s27
    %s16 = sphi 0, %s23
    %s17 = sphi 0, %s15
    %s18 = sphi 0, %s16
    %s19 = sphi 0, %s17
    %s20 = sphi 0, %s18
    %s32 = sphi 0, %s34
    %s35 = sphi 0, %s32
    %s36 = sphi 0, %s35
    %s52 = sphi 0, %s36
    %s56 = sphi 0, %s56
    %s58 = sphi 0, %s56
    %s59 = sphi 0, %s58
    %s73 = sphi 0, %s59
    %s81 = sphi 0, %s83
    %s84 = sphi 0, %s81
    %s85 = sphi 0, %s84
    %s101 = sphi 0, %s85
  $region4: #{attention_forward.3} parent=0 // loop_header_branch
    %11 = sbr.rel (%p9) target = $region8
  $region5: #{attention_forward.3} parent=0 // loop_body
    %s13 = ssub.s32 %s8, 1
    %s14 = ssub.s32 %s8, 2
    %s21 = sadd.s32 1, %s16
    %p22 = scmp.ge.s32.totalorder %s21, 1
    %s23 = scalar_select %p22, 0, %s21
    %s24 = sadd.s32 1, %s15
    %s25 = scalar_select %p22, %s24, %s15
    %p26 = scmp.ge.s32.totalorder %s25, 2
    %s27 = scalar_select %p26, 0, %s25
    %s28 = ssub.s32 %s15, %s27
    %s29 = ssub.s32 %s16, %s23
    %s30 = sor.u32 %s28, %s29
    %p31 = scmp.eq.s32.totalorder %s30, 0
    %s33 = sadd.s32 %s32, 1
    %s34 = scalar_select %p31, %s32, %s33
    %p37 = pneg %p31
    %p38 = scmp.eq.s32.totalorder %s8, 1
    %p39 = por %p37, %p38
    %p40 = scmp.ne.s32.totalorder %s32, %s35
    %p41 = scmp.eq.s32.totalorder %s8, 0
    %p42 = por %p40, %p41
    %p43 = scmp.ne.s32.totalorder %s32, %s35
    %p44 = scmp.eq.s32.totalorder %s13, 1
    %p45 = por %p43, %p44
    %p46 = scmp.ne.s32.totalorder %s35, %s36
    %p47 = scmp.eq.s32.totalorder %s13, 0
    %p48 = por %p46, %p47
    %p49 = scmp.ne.s32.totalorder %s35, %s36
    %p50 = scmp.eq.s32.totalorder %s14, 1
    %p51 = por %p49, %p50
    %p53 = scmp.ne.s32.totalorder %s36, %s52
    %p54 = scmp.eq.s32.totalorder %s14, 0
    %p55 = por %p53, %p54
    %s57 = sadd.s32 %s56, 1
    %p60 = scmp.eq.s32.totalorder %s8, 1
    %p61 = scmp.ne.s32.totalorder %s56, %s58
    %p62 = scmp.eq.s32.totalorder %s8, 0
    %p63 = por %p61, %p62
    %p64 = scmp.ne.s32.totalorder %s56, %s58
    %p65 = scmp.eq.s32.totalorder %s13, 1
    %p66 = por %p64, %p65
    %p67 = scmp.ne.s32.totalorder %s58, %s59
    %p68 = scmp.eq.s32.totalorder %s13, 0
    %p69 = por %p67, %p68
    %p70 = scmp.ne.s32.totalorder %s58, %s59
    %p71 = scmp.eq.s32.totalorder %s14, 1
    %p72 = por %p70, %p71
    %p74 = scmp.ne.s32.totalorder %s59, %s73
    %p75 = scmp.eq.s32.totalorder %s14, 0
    %p76 = por %p74, %p75
    %s77 = ssub.s32 %s15, %s27
    %s78 = ssub.s32 %s16, %s23
    %s79 = sor.u32 %s77, %s78
    %p80 = scmp.eq.s32.totalorder %s79, 0
    %s82 = sadd.s32 %s81, 1
    %s83 = scalar_select %p80, %s81, %s82
    %p86 = pneg %p80
    %p87 = scmp.eq.s32.totalorder %s8, 1
    %p88 = por %p86, %p87
    %p89 = scmp.ne.s32.totalorder %s81, %s84
    %p90 = scmp.eq.s32.totalorder %s8, 0
    %p91 = por %p89, %p90
    %p92 = scmp.ne.s32.totalorder %s81, %s84
    %p93 = scmp.eq.s32.totalorder %s13, 1
    %p94 = por %p92, %p93
    %p95 = scmp.ne.s32.totalorder %s84, %s85
    %p96 = scmp.eq.s32.totalorder %s13, 0
    %p97 = por %p95, %p96
    %p98 = scmp.ne.s32.totalorder %s84, %s85
    %p99 = scmp.eq.s32.totalorder %s14, 1
    %p100 = por %p98, %p99
    %p102 = scmp.ne.s32.totalorder %s85, %s101
    %p103 = scmp.eq.s32.totalorder %s14, 0
    %p104 = por %p102, %p103
    %p105 = scmp.le.s32.totalorder 1, %s8
    %p106 = scmp.lt.s32.totalorder %s8, 3
    %p107 = pnand %p105, %p106
    %p108 = pneg %p107
    // Predicated region
    $region9: #{attention_forward.3} parent=5 // pred_check
      _
    $region10: #{attention_forward.3} parent=5 // pred_check_branch
      %110 = sbr.rel (%p107) target = $region12
    $region11: #{attention_forward.3} parent=5 // pred_region
      %s111 = ssub.s32 %s8, 1
      // Predicated region
      $region13: #{attention_forward.3} parent=11 // pred_check
        %p112 = pneg %p69
      $region14: #{attention_forward.3} parent=11 // pred_check_branch
        %114 = sbr.rel (%p112) target = $region16
      $region15: #{attention_forward.3} parent=11 // pred_region
        _
      $region16: #{attention_forward.3} parent=11 // pred_fallthru
        _
    $region12: #{attention_forward.3} parent=5 // pred_fallthru
      _
    %p115 = scmp.lt.s32.totalorder %s8, 2
    // Predicated region
    $region17: #{attention_forward.3} parent=5 // pred_check
      %p116 = pneg %p115
    $region18: #{attention_forward.3} parent=5 // pred_check_branch
      %118 = sbr.rel (%p116) target = $region20
    $region19: #{attention_forward.3} parent=5 // pred_region
      // Predicated region
      $region21: #{attention_forward.3} parent=19 // pred_check
        %p119 = pneg %p42
      $region22: #{attention_forward.3} parent=19 // pred_check_branch
        %121 = sbr.rel (%p119) target = $region24
      $region23: #{attention_forward.3} parent=19 // pred_region
        %s122 = smul.u32 2, %s16
        %p123 = scmp.lt.s32.totalorder %s15, 1
        %s124 = scalar_select %p123, %s15, 1
        %p125 = scmp.lt.s32.totalorder %s122, 1
        %s126 = scalar_select %p125, %s122, 1
        %s127 = smul.addr %s124, 2
        %s128 = sadd.s32 %s126, %s127
        %s129 = smul.addr %s128, 8
        %s130 = scalar_lea.vmem %s0, %s129
        %s131 = smul.u32 2, %s16
      $region24: #{attention_forward.3} parent=19 // pred_fallthru
        _
    $region20: #{attention_forward.3} parent=5 // pred_fallthru
      _
    %p132 = scmp.le.s32.totalorder 1, %s8
    %p133 = scmp.lt.s32.totalorder %s8, 3
    %p134 = pnand %p132, %p133
    %p135 = pneg %p134
    // Predicated region
    $region25: #{attention_forward.3} parent=5 // pred_check
      _
    $region26: #{attention_forward.3} parent=5 // pred_check_branch
      %137 = sbr.rel (%p134) target = $region28
    $region27: #{attention_forward.3} parent=5 // pred_region
      %s138 = ssub.s32 %s8, 1
      %s139 = smul.u32 2, %s18
      %p140 = scmp.lt.s32.totalorder %s17, 1
      %s141 = scalar_select %p140, %s17, 1
      %p142 = scmp.lt.s32.totalorder %s139, 1
      %s143 = scalar_select %p142, %s139, 1
      %s144 = smul.addr %s141, 2
      %s145 = sadd.s32 %s143, %s144
      %s146 = smul.addr %s145, 8
      %s147 = scalar_lea.vmem %s0, %s146
      %p148 = pneg %p48
      %p149 = pneg %p45
      %p150 = pneg %p69
      %p151 = pneg %p66
      %p152 = pneg %p97
      %p153 = pneg %p94
      %s154 = smul.u32 2, %s18
      %p155 = scmp.lt.s32.totalorder %s17, 1
      %s156 = scalar_select %p155, %s17, 1
      %p157 = scmp.lt.s32.totalorder %s154, 1
      %s158 = scalar_select %p157, %s154, 1
      %s159 = smul.addr %s158, 6
      %s160 = smul.addr %s156, 12
      %s161 = sadd.s32 %s159, %s160
      %s162 = smul.addr %s161, 8
      %s163 = scalar_lea.vmem %s2, %s162
      %s164 = smul.u32 2, %s18
      %p165 = scmp.lt.s32.totalorder %s17, 1
      %s166 = scalar_select %p165, %s17, 1
      %p167 = scmp.lt.s32.totalorder %s164, 1
      %s168 = scalar_select %p167, %s164, 1
      %s169 = smul.addr %s166, 2
      %s170 = sadd.s32 %s168, %s169
      %s171 = smul.addr %s170, 8
      %s172 = scalar_lea.vmem %s0, %s171
      %s173 = smul.u32 2, %s18
      %s174 = smul.u32 2, %s18
      %p175 = scmp.lt.s32.totalorder %s17, 1
      %s176 = scalar_select %p175, %s17, 1
      %p177 = scmp.lt.s32.totalorder %s174, 1
      %s178 = scalar_select %p177, %s174, 1
      %s179 = smul.addr %s178, 6
      %s180 = smul.addr %s176, 12
      %s181 = sadd.s32 %s179, %s180
      %s182 = smul.addr %s181, 8
      %s183 = scalar_lea.vmem %s2, %s182
      %s184 = smul.u32 2, %s18
      %v185 = vld [vmem:[%s172] sm:$0xff]
      %v186 = vld [vmem:[%s172 + $0x8] sm:$0xff]
      %v187 = vld [vmem:[%s1] sm:$0xff]
      %v188 = vld [vmem:[%s1 + $0x8] sm:$0xff]
      %v189 = vld [vmem:[%s1 + $0x10] sm:$0xff]
      %v190 = vld [vmem:[%s1 + $0x18] sm:$0xff]
      %v191 = vld [vmem:[%s1 + $0x20] sm:$0xff]
      %v192 = vld [vmem:[%s1 + $0x28] sm:$0xff]
      %v193 = vld [vmem:[%s1 + $0x30] sm:$0xff]
      %v194 = vld [vmem:[%s1 + $0x38] sm:$0xff]
      %v195 = vld [vmem:[%s1 + $0x40] sm:$0xff]
      %v196 = vld [vmem:[%s1 + $0x48] sm:$0xff]
      %v197 = vld [vmem:[%s1 + $0x50] sm:$0xff]
      %v198 = vld [vmem:[%s1 + $0x58] sm:$0xff]
      %v199 = vld [vmem:[%s1 + $0x60] sm:$0xff]
      %v200 = vld [vmem:[%s1 + $0x68] sm:$0xff]
      %v201 = vld [vmem:[%s1 + $0x70] sm:$0xff]
      %v202 = vld [vmem:[%s1 + $0x78] sm:$0xff]
      %v203 = vld [vmem:[%s1 + $0x80] sm:$0xff]
      %v204 = vld [vmem:[%s1 + $0x88] sm:$0xff]
      %v205 = vld [vmem:[%s1 + $0x90] sm:$0xff]
      %v206 = vld [vmem:[%s1 + $0x98] sm:$0xff]
      %v207 = vld [vmem:[%s1 + $0xa0] sm:$0xff]
      %v208 = vld [vmem:[%s1 + $0xa8] sm:$0xff]
      %v209 = vld [vmem:[%s1 + $0xb0] sm:$0xff]
      %v210 = vld [vmem:[%s1 + $0xb8] sm:$0xff]
      %vm211 = vcmask 261120
      %v213 = vsel %vm211, %v185, 0
      %v216 = vsel %vm211, %v186, 0
      %218 = vmatpush.msra.mxu0 0.0
      %219 = vmatpush.msra.mxu0 0.0
      %220 = vmatpush.msra.mxu0 0.0
      %221 = vmatpush.msra.mxu0 0.0
      %222 = vmatpush.msra.mxu0 0.0
      %223 = vmatpush.msra.mxu0 0.0
      %224 = vmatpush.msra.mxu0 0.0
      %225 = vmatpush.msra.mxu0 0.0
      %226 = vmatpush.msra.mxu0 0.0
      %227 = vmatpush.msra.mxu0 0.0
      %228 = vmatpush.msra.mxu0 0.0
      %229 = vmatpush.msra.mxu0 0.0
      %230 = vmatpush.msra.mxu0 %v205
      %231 = vmatpush.msra.mxu0 %v199
      %232 = vmatpush.msra.mxu0 %v193
      %233 = vmatpush.msra.mxu0 %v187
      %234 = vmatmul.f32.gmra.mxu0 %v213
      %v235 = vpop.f32.mrf.mxu0
      %v236 = vadd.f32 0.0, %v235
      %237 = vmatmul.f32.gmra.mxu0 %v216
      %v238 = vpop.f32.mrf.mxu0
      %v239 = vadd.f32 0.0, %v238
      %240 = vdwg.mxu0
      %241 = vmatpush.msra.mxu0 0.0
      %242 = vmatpush.msra.mxu0 0.0
      %243 = vmatpush.msra.mxu0 0.0
      %244 = vmatpush.msra.mxu0 0.0
      %245 = vmatpush.msra.mxu0 0.0
      %246 = vmatpush.msra.mxu0 0.0
      %247 = vmatpush.msra.mxu0 0.0
      %248 = vmatpush.msra.mxu0 0.0
      %249 = vmatpush.msra.mxu0 0.0
      %250 = vmatpush.msra.mxu0 0.0
      %251 = vmatpush.msra.mxu0 0.0
      %252 = vmatpush.msra.mxu0 0.0
      %253 = vmatpush.msra.mxu0 %v206
      %254 = vmatpush.msra.mxu0 %v200
      %255 = vmatpush.msra.mxu0 %v194
      %256 = vmatpush.msra.mxu0 %v188
      %257 = vmatmul.f32.gmra.mxu0 %v213
      %v258 = vpop.f32.mrf.mxu0
      %v259 = vadd.f32 0.0, %v258
      %260 = vmatmul.f32.gmra.mxu0 %v216
      %v261 = vpop.f32.mrf.mxu0
      %v262 = vadd.f32 0.0, %v261
      %263 = vdwg.mxu0
      %264 = vmatpush.msra.mxu0 0.0
      %265 = vmatpush.msra.mxu0 0.0
      %266 = vmatpush.msra.mxu0 0.0
      %267 = vmatpush.msra.mxu0 0.0
      %268 = vmatpush.msra.mxu0 0.0
      %269 = vmatpush.msra.mxu0 0.0
      %270 = vmatpush.msra.mxu0 0.0
      %271 = vmatpush.msra.mxu0 0.0
      %272 = vmatpush.msra.mxu0 0.0
      %273 = vmatpush.msra.mxu0 0.0
      %274 = vmatpush.msra.mxu0 0.0
      %275 = vmatpush.msra.mxu0 0.0
      %276 = vmatpush.msra.mxu0 %v207
      %277 = vmatpush.msra.mxu0 %v201
      %278 = vmatpush.msra.mxu0 %v195
      %279 = vmatpush.msra.mxu0 %v189
      %280 = vmatmul.f32.gmra.mxu0 %v213
      %v281 = vpop.f32.mrf.mxu0
      %v282 = vadd.f32 0.0, %v281
      %283 = vmatmul.f32.gmra.mxu0 %v216
      %v284 = vpop.f32.mrf.mxu0
      %v285 = vadd.f32 0.0, %v284
      %286 = vdwg.mxu0
      %287 = vmatpush.msra.mxu0 0.0
      %288 = vmatpush.msra.mxu0 0.0
      %289 = vmatpush.msra.mxu0 0.0
      %290 = vmatpush.msra.mxu0 0.0
      %291 = vmatpush.msra.mxu0 0.0
      %292 = vmatpush.msra.mxu0 0.0
      %293 = vmatpush.msra.mxu0 0.0
      %294 = vmatpush.msra.mxu0 0.0
      %295 = vmatpush.msra.mxu0 0.0
      %296 = vmatpush.msra.mxu0 0.0
      %297 = vmatpush.msra.mxu0 0.0
      %298 = vmatpush.msra.mxu0 0.0
      %299 = vmatpush.msra.mxu0 %v208
      %300 = vmatpush.msra.mxu0 %v202
      %301 = vmatpush.msra.mxu0 %v196
      %302 = vmatpush.msra.mxu0 %v190
      %303 = vmatmul.f32.gmra.mxu0 %v213
      %v304 = vpop.f32.mrf.mxu0
      %v305 = vadd.f32 0.0, %v304
      %306 = vmatmul.f32.gmra.mxu0 %v216
      %v307 = vpop.f32.mrf.mxu0
      %v308 = vadd.f32 0.0, %v307
      %309 = vdwg.mxu0
      %310 = vmatpush.msra.mxu0 0.0
      %311 = vmatpush.msra.mxu0 0.0
      %312 = vmatpush.msra.mxu0 0.0
      %313 = vmatpush.msra.mxu0 0.0
      %314 = vmatpush.msra.mxu0 0.0
      %315 = vmatpush.msra.mxu0 0.0
      %316 = vmatpush.msra.mxu0 0.0
      %317 = vmatpush.msra.mxu0 0.0
      %318 = vmatpush.msra.mxu0 0.0
      %319 = vmatpush.msra.mxu0 0.0
      %320 = vmatpush.msra.mxu0 0.0
      %321 = vmatpush.msra.mxu0 0.0
      %322 = vmatpush.msra.mxu0 %v209
      %323 = vmatpush.msra.mxu0 %v203
      %324 = vmatpush.msra.mxu0 %v197
      %325 = vmatpush.msra.mxu0 %v191
      %326 = vmatmul.f32.gmra.mxu0 %v213
      %v327 = vpop.f32.mrf.mxu0
      %v328 = vadd.f32 0.0, %v327
      %329 = vmatmul.f32.gmra.mxu0 %v216
      %v330 = vpop.f32.mrf.mxu0
      %v331 = vadd.f32 0.0, %v330
      %332 = vdwg.mxu0
      %333 = vmatpush.msra.mxu0 0.0
      %334 = vmatpush.msra.mxu0 0.0
      %335 = vmatpush.msra.mxu0 0.0
      %336 = vmatpush.msra.mxu0 0.0
      %337 = vmatpush.msra.mxu0 0.0
      %338 = vmatpush.msra.mxu0 0.0
      %339 = vmatpush.msra.mxu0 0.0
      %340 = vmatpush.msra.mxu0 0.0
      %341 = vmatpush.msra.mxu0 0.0
      %342 = vmatpush.msra.mxu0 0.0
      %343 = vmatpush.msra.mxu0 0.0
      %344 = vmatpush.msra.mxu0 0.0
      %345 = vmatpush.msra.mxu0 %v210
      %346 = vmatpush.msra.mxu0 %v204
      %347 = vmatpush.msra.mxu0 %v198
      %348 = vmatpush.msra.mxu0 %v192
      %349 = vmatmul.f32.gmra.mxu0 %v213
      %v350 = vpop.f32.mrf.mxu0
      %v351 = vadd.f32 0.0, %v350
      %352 = vmatmul.f32.gmra.mxu0 %v216
      %v353 = vpop.f32.mrf.mxu0
      %v354 = vadd.f32 0.0, %v353
      %355 = vdwg.mxu0
      %356 = vst [vmem:[%s183] sm:$0xff] %v236
      %357 = vst [vmem:[%s183 + $0x8] sm:$0xff] %v259
      %358 = vst [vmem:[%s183 + $0x10] sm:$0xff] %v282
      %359 = vst [vmem:[%s183 + $0x18] sm:$0xff] %v305
      %360 = vst [vmem:[%s183 + $0x20] sm:$0xff] %v328
      %361 = vst [vmem:[%s183 + $0x28] sm:$0xff] %v351
      %362 = vst [vmem:[%s183 + $0x30] sm:$0xff] %v239
      %363 = vst [vmem:[%s183 + $0x38] sm:$0xff] %v262
      %364 = vst [vmem:[%s183 + $0x40] sm:$0xff] %v285
      %365 = vst [vmem:[%s183 + $0x48] sm:$0xff] %v308
      %366 = vst [vmem:[%s183 + $0x50] sm:$0xff] %v331
      %367 = vst [vmem:[%s183 + $0x58] sm:$0xff] %v354
      %s368 = smul.u32 2, %s18
      %p369 = scmp.lt.s32.totalorder %s17, 1
      %s370 = scalar_select %p369, %s17, 1
      %p371 = scmp.lt.s32.totalorder %s368, 1
      %s372 = scalar_select %p371, %s368, 1
      %s373 = smul.addr %s372, 6
      %s374 = smul.addr %s370, 12
      %s375 = sadd.s32 %s373, %s374
      %s376 = smul.addr %s375, 8
      %s377 = scalar_lea.vmem %s2, %s376
      // Predicated region
      $region29: #{attention_forward.3} parent=27 // pred_check
        %p378 = pneg %p94
      $region30: #{attention_forward.3} parent=27 // pred_check_branch
        %380 = sbr.rel (%p378) target = $region32
      $region31: #{attention_forward.3} parent=27 // pred_region
        %s381 = smul.u32 2, %s18
      $region32: #{attention_forward.3} parent=27 // pred_fallthru
        _
    $region28: #{attention_forward.3} parent=5 // pred_fallthru
      _
    %p382 = scmp.le.s32.totalorder 2, %s8
    // Predicated region
    $region33: #{attention_forward.3} parent=5 // pred_check
      %p383 = pneg %p382
    $region34: #{attention_forward.3} parent=5 // pred_check_branch
      %385 = sbr.rel (%p383) target = $region36
    $region35: #{attention_forward.3} parent=5 // pred_region
      %s386 = ssub.s32 %s8, 2
      // Predicated region
      $region37: #{attention_forward.3} parent=35 // pred_check
        %p387 = pneg %p100
      $region38: #{attention_forward.3} parent=35 // pred_check_branch
        %389 = sbr.rel (%p387) target = $region40
      $region39: #{attention_forward.3} parent=35 // pred_region
        %s390 = smul.u32 2, %s20
        %p391 = scmp.lt.s32.totalorder %s19, 1
        %s392 = scalar_select %p391, %s19, 1
        %p393 = scmp.lt.s32.totalorder %s390, 1
        %s394 = scalar_select %p393, %s390, 1
        %s395 = smul.addr %s394, 6
        %s396 = smul.addr %s392, 12
        %s397 = sadd.s32 %s395, %s396
        %s398 = smul.addr %s397, 8
        %s399 = scalar_lea.vmem %s2, %s398
      $region40: #{attention_forward.3} parent=35 // pred_fallthru
        _
    $region36: #{attention_forward.3} parent=5 // pred_fallthru
      _
  $region6: #{attention_forward.3} parent=0 // loop_footer
    %s12 = sadd.s32 1, %s8
  $region7: #{attention_forward.3} parent=0 // loop_footer_branch
    %7 = sbr.rel target = $region3
  $region8: #{attention_forward.3} parent=0 // loop_exit
    _

// kernel: attention_forward.5
$region0: #{attention_forward.5}
  #allocation0 [shape = 'u32[]', space=smem, size = 0x4, offset = 0x4, fixed_abs, tag = 'smem constant byte address 0x4 - core index']
  #allocation1 [shape = 'u32[72,128]{1,0:T(1,128)}', space=vmem, size = 0x9000, scoped, tag = 'internal scratch']
  %s0 = inlined_call_operand.vmem [shape: f32[2,16,256], index: 0, kind: input, shape index: {}]
  %s1 = inlined_call_operand.vmem [shape: f32[256,32], index: 1, kind: input, shape index: {}]
  %s2 = inlined_call_operand.vmem [shape: f32[1,32], index: 2, kind: input, shape index: {}]
  %s3 = inlined_call_operand.hbm [shape: f32[2,16,32], index: 3, kind: output, shape index: {}]
  %s4 = sld [smem:[#allocation0]]
  $region45: #{attention_forward.5} parent=0
    _
  %s6 = ssub.s32 1, %s4
  %s7 = scalar_select 0, %s6, %s4
  $region1: #{attention_forward.5} parent=0
    #allocation2 [shape = 'u8[16384]{0}', space=vmem, size = 0x4000, scoped, tag = 'output window, operand 0']
    #allocation3 [shape = 's32[2]{0}', space=sflag, size = 0x8, scoped, tag = 'scoped memory for attention_forward.5']
    %8 = vsyncpa [#allocation3], 0
    %s9 = scalar_lea.sflag [#allocation3], 1
    %10 = vsyncpa %s9, 0
    loop: start=0, step=1, limit=4
    $region2: #{attention_forward.5} parent=1 // loop_pre_header
      _
    $region3: #{attention_forward.5} parent=1 // loop_header
      %s12 = sphi 0, %s16
      %p13 = scmp.ge.s32.totalorder %s12, 4
      %s19 = sphi 0, %s31
      %s20 = sphi 0, %s27
      %s21 = sphi 0, %s19
      %s22 = sphi 0, %s20
      %s23 = sphi 0, %s21
      %s24 = sphi 0, %s22
      %s36 = sphi 0, %s38
      %s39 = sphi 0, %s36
      %s40 = sphi 0, %s39
      %s56 = sphi 0, %s40
      %s60 = sphi 0, %s60
      %s62 = sphi 0, %s60
      %s63 = sphi 0, %s62
      %s77 = sphi 0, %s63
      %s81 = sphi 0, %s81
      %s83 = sphi 0, %s81
      %s84 = sphi 0, %s83
      %s98 = sphi 0, %s84
      %s106 = sphi 0, %s108
      %s109 = sphi 0, %s106
      %s110 = sphi 0, %s109
      %s126 = sphi 0, %s110
    $region4: #{attention_forward.5} parent=1 // loop_header_branch
      %15 = sbr.rel (%p13) target = $region8
    $region5: #{attention_forward.5} parent=1 // loop_body
      %s17 = ssub.s32 %s12, 1
      %s18 = ssub.s32 %s12, 2
      %s25 = sadd.s32 1, %s20
      %p26 = scmp.ge.s32.totalorder %s25, 1
      %s27 = scalar_select %p26, 0, %s25
      %s28 = sadd.s32 1, %s19
      %s29 = scalar_select %p26, %s28, %s19
      %p30 = scmp.ge.s32.totalorder %s29, 2
      %s31 = scalar_select %p30, 0, %s29
      %s32 = ssub.s32 %s19, %s31
      %s33 = ssub.s32 %s20, %s27
      %s34 = sor.u32 %s32, %s33
      %p35 = scmp.eq.s32.totalorder %s34, 0
      %s37 = sadd.s32 %s36, 1
      %s38 = scalar_select %p35, %s36, %s37
      %p41 = pneg %p35
      %p42 = scmp.eq.s32.totalorder %s12, 1
      %p43 = por %p41, %p42
      %p44 = scmp.ne.s32.totalorder %s36, %s39
      %p45 = scmp.eq.s32.totalorder %s12, 0
      %p46 = por %p44, %p45
      %p47 = scmp.ne.s32.totalorder %s36, %s39
      %p48 = scmp.eq.s32.totalorder %s17, 1
      %p49 = por %p47, %p48
      %p50 = scmp.ne.s32.totalorder %s39, %s40
      %p51 = scmp.eq.s32.totalorder %s17, 0
      %p52 = por %p50, %p51
      %p53 = scmp.ne.s32.totalorder %s39, %s40
      %p54 = scmp.eq.s32.totalorder %s18, 1
      %p55 = por %p53, %p54
      %p57 = scmp.ne.s32.totalorder %s40, %s56
      %p58 = scmp.eq.s32.totalorder %s18, 0
      %p59 = por %p57, %p58
      %s61 = sadd.s32 %s60, 1
      %p64 = scmp.eq.s32.totalorder %s12, 1
      %p65 = scmp.ne.s32.totalorder %s60, %s62
      %p66 = scmp.eq.s32.totalorder %s12, 0
      %p67 = por %p65, %p66
      %p68 = scmp.ne.s32.totalorder %s60, %s62
      %p69 = scmp.eq.s32.totalorder %s17, 1
      %p70 = por %p68, %p69
      %p71 = scmp.ne.s32.totalorder %s62, %s63
      %p72 = scmp.eq.s32.totalorder %s17, 0
      %p73 = por %p71, %p72
      %p74 = scmp.ne.s32.totalorder %s62, %s63
      %p75 = scmp.eq.s32.totalorder %s18, 1
      %p76 = por %p74, %p75
      %p78 = scmp.ne.s32.totalorder %s63, %s77
      %p79 = scmp.eq.s32.totalorder %s18, 0
      %p80 = por %p78, %p79
      %s82 = sadd.s32 %s81, 1
      %p85 = scmp.eq.s32.totalorder %s12, 1
      %p86 = scmp.ne.s32.totalorder %s81, %s83
      %p87 = scmp.eq.s32.totalorder %s12, 0
      %p88 = por %p86, %p87
      %p89 = scmp.ne.s32.totalorder %s81, %s83
      %p90 = scmp.eq.s32.totalorder %s17, 1
      %p91 = por %p89, %p90
      %p92 = scmp.ne.s32.totalorder %s83, %s84
      %p93 = scmp.eq.s32.totalorder %s17, 0
      %p94 = por %p92, %p93
      %p95 = scmp.ne.s32.totalorder %s83, %s84
      %p96 = scmp.eq.s32.totalorder %s18, 1
      %p97 = por %p95, %p96
      %p99 = scmp.ne.s32.totalorder %s84, %s98
      %p100 = scmp.eq.s32.totalorder %s18, 0
      %p101 = por %p99, %p100
      %s102 = ssub.s32 %s19, %s31
      %s103 = ssub.s32 %s20, %s27
      %s104 = sor.u32 %s102, %s103
      %p105 = scmp.eq.s32.totalorder %s104, 0
      %s107 = sadd.s32 %s106, 1
      %s108 = scalar_select %p105, %s106, %s107
      %p111 = pneg %p105
      %p112 = scmp.eq.s32.totalorder %s12, 1
      %p113 = por %p111, %p112
      %p114 = scmp.ne.s32.totalorder %s106, %s109
      %p115 = scmp.eq.s32.totalorder %s12, 0
      %p116 = por %p114, %p115
      %p117 = scmp.ne.s32.totalorder %s106, %s109
      %p118 = scmp.eq.s32.totalorder %s17, 1
      %p119 = por %p117, %p118
      %p120 = scmp.ne.s32.totalorder %s109, %s110
      %p121 = scmp.eq.s32.totalorder %s17, 0
      %p122 = por %p120, %p121
      %p123 = scmp.ne.s32.totalorder %s109, %s110
      %p124 = scmp.eq.s32.totalorder %s18, 1
      %p125 = por %p123, %p124
      %p127 = scmp.ne.s32.totalorder %s110, %s126
      %p128 = scmp.eq.s32.totalorder %s18, 0
      %p129 = por %p127, %p128
      %p130 = scmp.le.s32.totalorder 1, %s12
      %p131 = scmp.lt.s32.totalorder %s12, 3
      %p132 = pnand %p130, %p131
      %p133 = pneg %p132
      // Predicated region
      $region9: #{attention_forward.5} parent=5 // pred_check
        _
      $region10: #{attention_forward.5} parent=5 // pred_check_branch
        %135 = sbr.rel (%p132) target = $region12
      $region11: #{attention_forward.5} parent=5 // pred_region
        %s136 = ssub.s32 %s12, 1
        // Predicated region
        $region13: #{attention_forward.5} parent=11 // pred_check
          %p137 = pneg %p73
        $region14: #{attention_forward.5} parent=11 // pred_check_branch
          %139 = sbr.rel (%p137) target = $region16
        $region15: #{attention_forward.5} parent=11 // pred_region
          _
        $region16: #{attention_forward.5} parent=11 // pred_fallthru
          _
        // Predicated region
        $region17: #{attention_forward.5} parent=11 // pred_check
          %p140 = pneg %p94
        $region18: #{attention_forward.5} parent=11 // pred_check_branch
          %142 = sbr.rel (%p140) target = $region20
        $region19: #{attention_forward.5} parent=11 // pred_region
          _
        $region20: #{attention_forward.5} parent=11 // pred_fallthru
          _
      $region12: #{attention_forward.5} parent=5 // pred_fallthru
        _
      %p143 = scmp.lt.s32.totalorder %s12, 2
      // Predicated region
      $region21: #{attention_forward.5} parent=5 // pred_check
        %p144 = pneg %p143
      $region22: #{attention_forward.5} parent=5 // pred_check_branch
        %146 = sbr.rel (%p144) target = $region24
      $region23: #{attention_forward.5} parent=5 // pred_region
        // Predicated region
        $region25: #{attention_forward.5} parent=23 // pred_check
          %p147 = pneg %p46
        $region26: #{attention_forward.5} parent=23 // pred_check_branch
          %149 = sbr.rel (%p147) target = $region28
        $region27: #{attention_forward.5} parent=23 // pred_region
          %s150 = smul.u32 2, %s20
          %p151 = scmp.lt.s32.totalorder %s19, 1
          %s152 = scalar_select %p151, %s19, 1
          %p153 = scmp.lt.s32.totalorder %s150, 1
          %s154 = scalar_select %p153, %s150, 1
          %s155 = smul.addr %s154, 2
          %s156 = smul.addr %s152, 4
          %s157 = sadd.s32 %s155, %s156
          %s158 = smul.addr %s157, 8
          %s159 = scalar_lea.vmem %s0, %s158
          %s160 = smul.u32 2, %s20
        $region28: #{attention_forward.5} parent=23 // pred_fallthru
          _
      $region24: #{attention_forward.5} parent=5 // pred_fallthru
        _
      %p161 = scmp.le.s32.totalorder 1, %s12
      %p162 = scmp.lt.s32.totalorder %s12, 3
      %p163 = pnand %p161, %p162
      %p164 = pneg %p163
      // Predicated region
      $region29: #{attention_forward.5} parent=5 // pred_check
        _
      $region30: #{attention_forward.5} parent=5 // pred_check_branch
        %166 = sbr.rel (%p163) target = $region32
      $region31: #{attention_forward.5} parent=5 // pred_region
        %s167 = ssub.s32 %s12, 1
        %s168 = smul.u32 2, %s22
        %p169 = scmp.lt.s32.totalorder %s21, 1
        %s170 = scalar_select %p169, %s21, 1
        %p171 = scmp.lt.s32.totalorder %s168, 1
        %s172 = scalar_select %p171, %s168, 1
        %s173 = smul.addr %s172, 2
        %s174 = smul.addr %s170, 4
        %s175 = sadd.s32 %s173, %s174
        %s176 = smul.addr %s175, 8
        %s177 = scalar_lea.vmem %s0, %s176
        %p178 = pneg %p52
        %p179 = pneg %p49
        %p180 = pneg %p73
        %p181 = pneg %p70
        %p182 = pneg %p94
        %p183 = pneg %p91
        %p184 = pneg %p122
        %p185 = pneg %p119
        %s186 = sand.u32 %s109, 1
        %s187 = scalar_lea.sflag [#allocation3], %s186
        %s188 = sand.u32 %s109, 1
        %s189 = smul.addr %s188, 16
        %s190 = scalar_lea.vmem [#allocation2], %s189
        %s191 = smul.u32 2, %s22
        %p192 = scmp.lt.s32.totalorder %s21, 1
        %s193 = scalar_select %p192, %s21, 1
        %p194 = scmp.lt.s32.totalorder %s191, 1
        %s195 = scalar_select %p194, %s191, 1
        %s196 = smul.addr %s195, 2
        %s197 = smul.addr %s193, 4
        %s198 = sadd.s32 %s196, %s197
        %s199 = smul.addr %s198, 8
        %s200 = scalar_lea.vmem %s0, %s199
        %s201 = smul.u32 2, %s22
        %s202 = smul.u32 2, %s22
        %v203 = vld [vmem:[%s200] sm:$0xff]
        %v204 = vld [vmem:[%s200 + $0x8] sm:$0xff]
        %v205 = vld [vmem:[%s200 + $0x10] sm:$0xff]
        %v206 = vld [vmem:[%s200 + $0x18] sm:$0xff]
        %v207 = vld [vmem:[%s1] sm:$0xff]
        %v208 = vld [vmem:[%s1 + $0x8] sm:$0xff]
        %v209 = vld [vmem:[%s1 + $0x10] sm:$0xff]
        %v210 = vld [vmem:[%s1 + $0x18] sm:$0xff]
        %v211 = vld [vmem:[%s1 + $0x20] sm:$0xff]
        %v212 = vld [vmem:[%s1 + $0x28] sm:$0xff]
        %v213 = vld [vmem:[%s1 + $0x30] sm:$0xff]
        %v214 = vld [vmem:[%s1 + $0x38] sm:$0xff]
        %v215 = vld [vmem:[%s1 + $0x40] sm:$0xff]
        %v216 = vld [vmem:[%s1 + $0x48] sm:$0xff]
        %v217 = vld [vmem:[%s1 + $0x50] sm:$0xff]
        %v218 = vld [vmem:[%s1 + $0x58] sm:$0xff]
        %v219 = vld [vmem:[%s1 + $0x60] sm:$0xff]
        %v220 = vld [vmem:[%s1 + $0x68] sm:$0xff]
        %v221 = vld [vmem:[%s1 + $0x70] sm:$0xff]
        %v222 = vld [vmem:[%s1 + $0x78] sm:$0xff]
        %v223 = vld [vmem:[%s1 + $0x80] sm:$0xff]
        %v224 = vld [vmem:[%s1 + $0x88] sm:$0xff]
        %v225 = vld [vmem:[%s1 + $0x90] sm:$0xff]
        %v226 = vld [vmem:[%s1 + $0x98] sm:$0xff]
        %v227 = vld [vmem:[%s1 + $0xa0] sm:$0xff]
        %v228 = vld [vmem:[%s1 + $0xa8] sm:$0xff]
        %v229 = vld [vmem:[%s1 + $0xb0] sm:$0xff]
        %v230 = vld [vmem:[%s1 + $0xb8] sm:$0xff]
        %v231 = vld [vmem:[%s1 + $0xc0] sm:$0xff]
        %v232 = vld [vmem:[%s1 + $0xc8] sm:$0xff]
        %v233 = vld [vmem:[%s1 + $0xd0] sm:$0xff]
        %v234 = vld [vmem:[%s1 + $0xd8] sm:$0xff]
        %v235 = vld [vmem:[%s1 + $0xe0] sm:$0xff]
        %v236 = vld [vmem:[%s1 + $0xe8] sm:$0xff]
        %v237 = vld [vmem:[%s1 + $0xf0] sm:$0xff]
        %v238 = vld [vmem:[%s1 + $0xf8] sm:$0xff]
        %v239 = vld [vmem:[%s2] sm:$0x1]
        %v241 = vperm.slane %v239, 0
        %243 = vmatpush.msra.mxu0 %v222
        %244 = vmatpush.msra.mxu0 %v221
        %245 = vmatpush.msra.mxu0 %v220
        %246 = vmatpush.msra.mxu0 %v219
        %247 = vmatpush.msra.mxu0 %v218
        %248 = vmatpush.msra.mxu0 %v217
        %249 = vmatpush.msra.mxu0 %v216
        %250 = vmatpush.msra.mxu0 %v215
        %251 = vmatpush.msra.mxu0 %v214
        %252 = vmatpush.msra.mxu0 %v213
        %253 = vmatpush.msra.mxu0 %v212
        %254 = vmatpush.msra.mxu0 %v211
        %255 = vmatpush.msra.mxu0 %v210
        %256 = vmatpush.msra.mxu0 %v209
        %257 = vmatpush.msra.mxu0 %v208
        %258 = vmatpush.msra.mxu0 %v207
        %259 = vmatmul.f32.gmra.mxu0 %v203
        %v260 = vpop.f32.mrf.mxu0
        %v261 = vadd.f32 %v241, %v260
        %262 = vmatmul.f32.gmra.mxu0 %v205
        %v263 = vpop.f32.mrf.mxu0
        %v264 = vadd.f32 %v241, %v263
        %265 = vdwg.mxu0
        %266 = vmatpush.msra.mxu0 %v238
        %267 = vmatpush.msra.mxu0 %v237
        %268 = vmatpush.msra.mxu0 %v236
        %269 = vmatpush.msra.mxu0 %v235
        %270 = vmatpush.msra.mxu0 %v234
        %271 = vmatpush.msra.mxu0 %v233
        %272 = vmatpush.msra.mxu0 %v232
        %273 = vmatpush.msra.mxu0 %v231
        %274 = vmatpush.msra.mxu0 %v230
        %275 = vmatpush.msra.mxu0 %v229
        %276 = vmatpush.msra.mxu0 %v228
        %277 = vmatpush.msra.mxu0 %v227
        %278 = vmatpush.msra.mxu0 %v226
        %279 = vmatpush.msra.mxu0 %v225
        %280 = vmatpush.msra.mxu0 %v224
        %281 = vmatpush.msra.mxu0 %v223
        %282 = vmatmul.f32.gmra.mxu0 %v204
        %v283 = vpop.f32.mrf.mxu0
        %v284 = vadd.f32 %v261, %v283
        %285 = vmatmul.f32.gmra.mxu0 %v206
        %v286 = vpop.f32.mrf.mxu0
        %v287 = vadd.f32 %v264, %v286
        %288 = vdwg.mxu0
        %vm289 = vcmask 261120
        %290 = vst.msk [vmem:[%s190] sm:$0xff] %vm289, %v284
        %291 = vst.msk [vmem:[%s190 + $0x8] sm:$0xff] %vm289, %v287
        %s292 = sand.u32 %s109, 1
        %s293 = scalar_lea.sflag [#allocation3], %s292
        %s294 = sand.u32 %s109, 1
        %s295 = smul.addr %s294, 16
        %s296 = scalar_lea.vmem [#allocation2], %s295
        // Predicated region
        $region33: #{attention_forward.5} parent=31 // pred_check
          %p297 = pneg %p119
        $region34: #{attention_forward.5} parent=31 // pred_check_branch
          %299 = sbr.rel (%p297) target = $region36
        $region35: #{attention_forward.5} parent=31 // pred_region
          %s300 = smul.u32 2, %s22
          %302 = vsyncadd %s293, 0
          %s303 = smul.addr %s21, 2
          %s304 = sadd.s32 %s300, %s303
          %s305 = smul.addr %s304, 8
          %s306 = scalar_lea.hbm %s3, %s305
          %s307 = sshll.u32 %s296, 4
          %s308 = int_to_ptr.vmem [resolvable:$true] %s307
          %s309 = sshll.u32 %s306, 4
          %s310 = int_to_ptr.hbm [resolvable:$true] %s309
          %315 = dma.vmem_to_hbm [thread:$0]  %s308, 256, %s310, %s293, 128, 128, 8
        $region36: #{attention_forward.5} parent=31 // pred_fallthru
          _
      $region32: #{attention_forward.5} parent=5 // pred_fallthru
        _
      %p316 = scmp.le.s32.totalorder 2, %s12
      // Predicated region
      $region37: #{attention_forward.5} parent=5 // pred_check
        %p317 = pneg %p316
      $region38: #{attention_forward.5} parent=5 // pred_check_branch
        %319 = sbr.rel (%p317) target = $region40
      $region39: #{attention_forward.5} parent=5 // pred_region
        %s320 = ssub.s32 %s12, 2
        // Predicated region
        $region41: #{attention_forward.5} parent=39 // pred_check
          %p321 = pneg %p125
        $region42: #{attention_forward.5} parent=39 // pred_check_branch
          %323 = sbr.rel (%p321) target = $region44
        $region43: #{attention_forward.5} parent=39 // pred_region
          %s324 = sand.u32 %s110, 1
          %s325 = scalar_lea.sflag [#allocation3], %s324
          %s326 = sand.u32 %s110, 1
          %s327 = smul.addr %s326, 16
          %s328 = scalar_lea.vmem [#allocation2], %s327
          %330 = dma.done %s325, 256
        $region44: #{attention_forward.5} parent=39 // pred_fallthru
          _
      $region40: #{attention_forward.5} parent=5 // pred_fallthru
        _
    $region6: #{attention_forward.5} parent=1 // loop_footer
      %s16 = sadd.s32 1, %s12
    $region7: #{attention_forward.5} parent=1 // loop_footer_branch
      %11 = sbr.rel target = $region3
    $region8: #{attention_forward.5} parent=1 // loop_exit
      _
    %331 = vsyncpa [#allocation3], 1
    %s332 = scalar_lea.sflag [#allocation3], 1
    %333 = vsyncpa %s332, 1

</llo_original>
